<compile_context>
chip_gen: v6e
topology: v6e:2x2x1
jax: 0.10.0
libtpu: 0.0.40
codegen_flags: <defaults>
</compile_context>

<pallas_src>
import functools

import numpy as np
import jax
import jax.numpy as jnp
from jax.experimental import pallas as pl
from jax.experimental.pallas import tpu as pltpu


def _trainer_kernel(a_ref, s_ref, x0_ref, nz_ref, emb_ref,
                    w1_ref, w2_ref, b2_ref, loss_ref,
                    xt_ref, z_ref, *, bt, hw):
    """One grid step = `bt` images.

    a_ref, s_ref : (B_pad,) f32 SMEM   per-image sqrt(abar_t), sqrt(1-abar_t)
    x0_ref       : (bt, C, HW) bf16    clean images (lane axis = HW)
    nz_ref       : (bt, C, HW) bf16    gaussian noise
    emb_ref      : (bt, HID, 1) f32    time+class embedding (+ b1 folded in)
    w1_ref       : (HID, C) f32        1x1-conv layer 1
    w2_ref       : (C, HID) f32        1x1-conv layer 2
    b2_ref       : (C, 1)  f32
    loss_ref     : (bt, C, HW) f32     elementwise MSE (reduction='none')
    xt_ref       : (C,  bt*HW) f32     VMEM scratch: channel-major x_t slab
    z_ref        : (HID, bt*HW) f32    VMEM scratch: hidden activations
    """
    blk = pl.program_id(0)
    base = blk * bt
    hid = z_ref.shape[0]

    # ---- stage 1: q-sample mix per image into the channel-major slab, and
    #      pre-fill z with the per-image conditioning (lane-broadcast column).
    for b in range(bt):
        sl = slice(b * hw, (b + 1) * hw)
        a = a_ref[base + b]                       # scalar from SMEM
        s = s_ref[base + b]
        x0 = x0_ref[b].astype(jnp.float32)        # (C, HW)
        nz = nz_ref[b].astype(jnp.float32)        # (C, HW)
        xt_ref[:, sl] = a * x0 + s * nz           # Algorithm 1 q-sample
        z_ref[:, sl] = jnp.broadcast_to(emb_ref[b], (hid, hw))

    # ---- stage 2: synthetic epsilon-model, one big matmul per layer over
    #      the whole N = bt*HW slab (K=4 / K=32 contractions on the MXU).
    z_ref[...] = z_ref[...] + jnp.dot(
        w1_ref[...], xt_ref[...], preferred_element_type=jnp.float32)
    h = jnp.dot(w2_ref[...], jnp.maximum(z_ref[...], 0.0),
                preferred_element_type=jnp.float32) + b2_ref[...]   # (C, bt*HW)

    # ---- stage 3: F.mse_loss(h, noise, reduction='none'), written back per
    #      image into the natural (batch, C, HW) layout (lane-dense stores).
    # NOTE: if the caller reduces the loss, an in-kernel reduction would save
    #       the full-size HBM write; kept elementwise to match the module.
    for b in range(bt):
        diff = h[:, b * hw:(b + 1) * hw] - nz_ref[b].astype(jnp.float32)
        loss_ref[b] = diff * diff


def gaussian_diffusion_trainer_loss(x_0, noise, sqrt_ab_t, sqrt_1m_ab_t,
                                    cond_emb, w1, w2, b2, *,
                                    batch_tile=128,
                                    stream_dtype=jnp.bfloat16):
    """x_0, noise: (B, C, H, W); sqrt_ab_t, sqrt_1m_ab_t: (B,) gathered coefs;
    cond_emb: (B, HID) time+class embedding with b1 already folded in."""
    B, C, H, W = x_0.shape
    HW = H * W
    HID = cond_emb.shape[-1]

    bt = max(1, min(batch_tile, B))
    n_blk = -(-B // bt)
    B_pad = n_blk * bt
    pad = B_pad - B

    # Free reshapes (NCHW is already (B, C, HW) contiguous); bf16 stream casts.
    x0 = x_0.reshape(B, C, HW).astype(stream_dtype)
    nz = noise.reshape(B, C, HW).astype(stream_dtype)
    a_vec = sqrt_ab_t.reshape(B).astype(jnp.float32)
    s_vec = sqrt_1m_ab_t.reshape(B).astype(jnp.float32)
    emb = cond_emb.reshape(B, HID, 1).astype(jnp.float32)

    if pad:
        x0 = jnp.pad(x0, ((0, pad), (0, 0), (0, 0)))
        nz = jnp.pad(nz, ((0, pad), (0, 0), (0, 0)))
        a_vec = jnp.pad(a_vec, (0, pad))
        s_vec = jnp.pad(s_vec, (0, pad))
        emb = jnp.pad(emb, ((0, pad), (0, 0), (0, 0)))

    w1f = w1.astype(jnp.float32)
    w2f = w2.astype(jnp.float32)
    b2f = b2.reshape(C, 1).astype(jnp.float32)

    kernel = functools.partial(_trainer_kernel, bt=bt, hw=HW)

    grid_spec = pltpu.PrefetchScalarGridSpec(
        num_scalar_prefetch=0,
        grid=(n_blk,),
        in_specs=[
            pl.BlockSpec(memory_space=pltpu.MemorySpace.SMEM),   # a_vec (B_pad,)
            pl.BlockSpec(memory_space=pltpu.MemorySpace.SMEM),   # s_vec (B_pad,)
            pl.BlockSpec((bt, C, HW), lambda i: (i, 0, 0)),      # x0
            pl.BlockSpec((bt, C, HW), lambda i: (i, 0, 0)),      # noise
            pl.BlockSpec((bt, HID, 1), lambda i: (i, 0, 0)),     # cond emb
            pl.BlockSpec((HID, C), lambda i: (0, 0)),            # w1
            pl.BlockSpec((C, HID), lambda i: (0, 0)),            # w2
            pl.BlockSpec((C, 1), lambda i: (0, 0)),              # b2
        ],
        out_specs=pl.BlockSpec((bt, C, HW), lambda i: (i, 0, 0)),
        scratch_shapes=[
            pltpu.VMEM((C, bt * HW), jnp.float32),               # x_t slab
            pltpu.VMEM((HID, bt * HW), jnp.float32),             # hidden slab
        ],
    )

    loss = pl.pallas_call(
        kernel,
        out_shape=jax.ShapeDtypeStruct((B_pad, C, HW), jnp.float32),
        grid_spec=grid_spec,
        compiler_params=pltpu.CompilerParams(
            dimension_semantics=("parallel",),          # batch tiles independent
            vmem_limit_bytes=48 * 1024 * 1024,          # safe on v5e/v6e/v7x
        ),
    )(a_vec, s_vec, x0, nz, emb, w1f, w2f, b2f)

    return loss[:B].reshape(B, C, H, W)


def _reference_loss(x_0, noise, a_vec, s_vec, cond_emb, w1, w2, b2,
                    stream_dtype=jnp.bfloat16):
    """Pure-JAX reference (same bf16 input quantization as the kernel)."""
    B, C, H, W = x_0.shape
    x0 = x_0.reshape(B, C, H * W).astype(stream_dtype).astype(jnp.float32)
    nz = noise.reshape(B, C, H * W).astype(stream_dtype).astype(jnp.float32)
    xt = a_vec[:, None, None] * x0 + s_vec[:, None, None] * nz
    z = jnp.einsum('hc,bcw->bhw', w1, xt) + cond_emb[:, :, None]
    h = jnp.einsum('ch,bhw->bcw', w2, jnp.maximum(z, 0.0)) + b2.reshape(1, C, 1)
    d = h - nz
    return (d * d).reshape(B, C, H, W)


if __name__ == "__main__":
    # ---- config (matches GaussianDiffusionTrainer __init__ semantics) ----
    beta_1, beta_T, T = 1e-4, 0.02, 100
    num_class, cfg = 10, True
    B, C, H, W = 8, 4, 16, 16
    HID = 32

    # buffers (computed in float64 like torch .double(), then cast)
    betas = np.linspace(beta_1, beta_T, T, dtype=np.float64)
    alphas = 1.0 - betas
    alphas_bar = np.cumprod(alphas, axis=0)
    sqrt_alphas_bar = np.sqrt(alphas_bar).astype(np.float32)
    sqrt_one_minus_alphas_bar = np.sqrt(1.0 - alphas_bar).astype(np.float32)

    # ---- deterministic synthetic model parameters ----
    key = jax.random.PRNGKey(0)
    (k_w1, k_w2, k_temb, k_cemb,
     k_x, k_t, k_noise, k_y, k_u) = jax.random.split(key, 9)
    w1 = jax.random.normal(k_w1, (HID, C), jnp.float32) * 0.1
    b1 = jnp.zeros((HID,), jnp.float32)
    w2 = jax.random.normal(k_w2, (C, HID), jnp.float32) * 0.1
    b2 = jnp.zeros((C, 1), jnp.float32)
    time_table = jax.random.normal(k_temb, (T, HID), jnp.float32) * 0.1
    # last row of class table = "null" / unconditional embedding
    class_table = jax.random.normal(k_cemb, (num_class + 1, HID), jnp.float32) * 0.1

    # ---- forward-pass inputs & RNG draws (glue) ----
    x_0 = jax.random.normal(k_x, (B, C, H, W), jnp.float32)
    y_0 = jax.random.randint(k_y, (B,), 0, num_class)
    t = jax.random.randint(k_t, (B,), 0, T)
    noise = jax.random.normal(k_noise, (B, C, H, W), jnp.float32)

    # classifier-free guidance: drop the class label for the whole batch with
    # prob 1/10 (matches the reference's single torch.rand(1) draw).
    u = jax.random.uniform(k_u, ())
    uncond = jnp.logical_and(jnp.asarray(cfg), u < 0.1)
    cls_emb = jnp.where(uncond,
                        class_table[num_class][None, :],
                        class_table[y_0])
    cond_emb = (time_table[t] + cls_emb + b1[None, :]).astype(jnp.float32)  # (B, HID)

    # per-batch diffusion coefficients (extract(...) gather done in glue)
    sab = jnp.asarray(sqrt_alphas_bar)[t]
    somab = jnp.asarray(sqrt_one_minus_alphas_bar)[t]

    loss = gaussian_diffusion_trainer_loss(
        x_0, noise, sab, somab, cond_emb, w1, w2, b2, batch_tile=4)
    loss = jax.block_until_ready(loss)

    ref = _reference_loss(x_0, noise, sab, somab, cond_emb, w1, w2, b2)

    assert loss.shape == (B, C, H, W)
    assert bool(jnp.all(jnp.isfinite(loss)))
    assert bool(jnp.allclose(loss, ref, rtol=5e-2, atol=1e-2)), \
        float(jnp.max(jnp.abs(loss - ref)))
    print("KERNEL_OK")
</pallas_src>

<mosaic_0001>
module attributes {stable_mosaic.version = 11 : i64} {
  func.func @_trainer_kernel(%arg0: i32, %arg1: memref<8xf32, #tpu.memory_space<smem>>, %arg2: memref<8xf32, #tpu.memory_space<smem>>, %arg3: memref<4x4x256xbf16, #tpu.memory_space<vmem>>, %arg4: memref<4x4x256xbf16, #tpu.memory_space<vmem>>, %arg5: memref<4x32x1xf32, #tpu.memory_space<vmem>>, %arg6: memref<32x4xf32, #tpu.memory_space<vmem>>, %arg7: memref<4x32xf32, #tpu.memory_space<vmem>>, %arg8: memref<4x1xf32, #tpu.memory_space<vmem>>, %arg9: memref<4x4x256xf32, #tpu.memory_space<vmem>>, %arg10: memref<4x1024xf32, #tpu.memory_space<vmem>>, %arg11: memref<32x1024xf32, #tpu.memory_space<vmem>>) attributes {dimension_semantics = [#tpu.dimension_semantics<parallel>], iteration_bounds = array<i64: 2>, scalar_prefetch = 0 : i64, scratch_operands = 2 : i64, tpu.core_type = #tpu.core_type<tc>, window_params = [{transform_indices = @transform_0, window_bounds = array<i64: 8>}, {transform_indices = @transform_1, window_bounds = array<i64: 8>}, {transform_indices = @transform_2, window_bounds = array<i64: 4, 4, 256>}, {transform_indices = @transform_3, window_bounds = array<i64: 4, 4, 256>}, {transform_indices = @transform_4, window_bounds = array<i64: 4, 32, 1>}, {pipeline_mode = #tpu.pipeline_mode<synchronous>, transform_indices = @transform_5, window_bounds = array<i64: 32, 4>}, {pipeline_mode = #tpu.pipeline_mode<synchronous>, transform_indices = @transform_6, window_bounds = array<i64: 4, 32>}, {pipeline_mode = #tpu.pipeline_mode<synchronous>, transform_indices = @transform_7, window_bounds = array<i64: 4, 1>}, {transform_indices = @transform_8, window_bounds = array<i64: 4, 4, 256>}]} {
    %c4_i32 = arith.constant 4 : i32
    %0 = arith.muli %arg0, %c4_i32 : i32
    %c0_i32 = arith.constant 0 : i32
    %1 = arith.addi %0, %c0_i32 : i32
    %2 = arith.index_cast %1 : i32 to index
    %3 = memref.load %arg1[%2] : memref<8xf32, #tpu.memory_space<smem>>
    %c0_i32_0 = arith.constant 0 : i32
    %4 = arith.addi %0, %c0_i32_0 : i32
    %5 = arith.index_cast %4 : i32 to index
    %6 = memref.load %arg2[%5] : memref<8xf32, #tpu.memory_space<smem>>
    %c0 = arith.constant 0 : index
    %c0_1 = arith.constant 0 : index
    %c0_2 = arith.constant 0 : index
    %7 = vector.load %arg3[%c0, %c0_1, %c0_2] : memref<4x4x256xbf16, #tpu.memory_space<vmem>>, vector<1x4x256xbf16>
    %8 = vector.shape_cast %7 : vector<1x4x256xbf16> to vector<4x256xbf16>
    %9 = arith.extf %8 : vector<4x256xbf16> to vector<4x256xf32>
    %c0_3 = arith.constant 0 : index
    %c0_4 = arith.constant 0 : index
    %c0_5 = arith.constant 0 : index
    %10 = vector.load %arg4[%c0_3, %c0_4, %c0_5] : memref<4x4x256xbf16, #tpu.memory_space<vmem>>, vector<1x4x256xbf16>
    %11 = vector.shape_cast %10 : vector<1x4x256xbf16> to vector<4x256xbf16>
    %12 = arith.extf %11 : vector<4x256xbf16> to vector<4x256xf32>
    %13 = vector.broadcast %3 : f32 to vector<4x256xf32>
    %14 = arith.mulf %13, %9 : vector<4x256xf32>
    %15 = vector.broadcast %6 : f32 to vector<4x256xf32>
    %16 = arith.mulf %15, %12 : vector<4x256xf32>
    %17 = arith.addf %14, %16 : vector<4x256xf32>
    %c0_6 = arith.constant 0 : index
    %c0_7 = arith.constant 0 : index
    %18 = vector.load %arg10[%c0_6, %c0_7] : memref<4x1024xf32, #tpu.memory_space<vmem>>, vector<4x256xf32>
    tpu.vector_store %arg10[%c0_6, %c0_7], %17 {strides = array<i32>} : memref<4x1024xf32, #tpu.memory_space<vmem>>, vector<4x256xf32>,
    %c0_8 = arith.constant 0 : index
    %c0_9 = arith.constant 0 : index
    %c0_10 = arith.constant 0 : index
    %19 = vector.load %arg5[%c0_8, %c0_9, %c0_10] : memref<4x32x1xf32, #tpu.memory_space<vmem>>, vector<1x32x1xf32>
    %20 = vector.shape_cast %19 : vector<1x32x1xf32> to vector<32x1xf32>
    %21 = vector.shape_cast %20 : vector<32x1xf32> to vector<32x1xf32>
    %22 = vector.broadcast %21 : vector<32x1xf32> to vector<32x256xf32>
    %c0_11 = arith.constant 0 : index
    %c0_12 = arith.constant 0 : index
    %23 = vector.load %arg11[%c0_11, %c0_12] : memref<32x1024xf32, #tpu.memory_space<vmem>>, vector<32x256xf32>
    tpu.vector_store %arg11[%c0_11, %c0_12], %22 {strides = array<i32>} : memref<32x1024xf32, #tpu.memory_space<vmem>>, vector<32x256xf32>,
    %c1_i32 = arith.constant 1 : i32
    %24 = arith.addi %0, %c1_i32 : i32
    %25 = arith.index_cast %24 : i32 to index
    %26 = memref.load %arg1[%25] : memref<8xf32, #tpu.memory_space<smem>>
    %c1_i32_13 = arith.constant 1 : i32
    %27 = arith.addi %0, %c1_i32_13 : i32
    %28 = arith.index_cast %27 : i32 to index
    %29 = memref.load %arg2[%28] : memref<8xf32, #tpu.memory_space<smem>>
    %c1 = arith.constant 1 : index
    %c0_14 = arith.constant 0 : index
    %c0_15 = arith.constant 0 : index
    %30 = vector.load %arg3[%c1, %c0_14, %c0_15] : memref<4x4x256xbf16, #tpu.memory_space<vmem>>, vector<1x4x256xbf16>
    %31 = vector.shape_cast %30 : vector<1x4x256xbf16> to vector<4x256xbf16>
    %32 = arith.extf %31 : vector<4x256xbf16> to vector<4x256xf32>
    %c1_16 = arith.constant 1 : index
    %c0_17 = arith.constant 0 : index
    %c0_18 = arith.constant 0 : index
    %33 = vector.load %arg4[%c1_16, %c0_17, %c0_18] : memref<4x4x256xbf16, #tpu.memory_space<vmem>>, vector<1x4x256xbf16>
    %34 = vector.shape_cast %33 : vector<1x4x256xbf16> to vector<4x256xbf16>
    %35 = arith.extf %34 : vector<4x256xbf16> to vector<4x256xf32>
    %36 = vector.broadcast %26 : f32 to vector<4x256xf32>
    %37 = arith.mulf %36, %32 : vector<4x256xf32>
    %38 = vector.broadcast %29 : f32 to vector<4x256xf32>
    %39 = arith.mulf %38, %35 : vector<4x256xf32>
    %40 = arith.addf %37, %39 : vector<4x256xf32>
    %c0_19 = arith.constant 0 : index
    %c256 = arith.constant 256 : index
    %41 = vector.load %arg10[%c0_19, %c256] : memref<4x1024xf32, #tpu.memory_space<vmem>>, vector<4x256xf32>
    tpu.vector_store %arg10[%c0_19, %c256], %40 {strides = array<i32>} : memref<4x1024xf32, #tpu.memory_space<vmem>>, vector<4x256xf32>,
    %c1_20 = arith.constant 1 : index
    %c0_21 = arith.constant 0 : index
    %c0_22 = arith.constant 0 : index
    %42 = vector.load %arg5[%c1_20, %c0_21, %c0_22] : memref<4x32x1xf32, #tpu.memory_space<vmem>>, vector<1x32x1xf32>
    %43 = vector.shape_cast %42 : vector<1x32x1xf32> to vector<32x1xf32>
    %44 = vector.shape_cast %43 : vector<32x1xf32> to vector<32x1xf32>
    %45 = vector.broadcast %44 : vector<32x1xf32> to vector<32x256xf32>
    %c0_23 = arith.constant 0 : index
    %c256_24 = arith.constant 256 : index
    %46 = vector.load %arg11[%c0_23, %c256_24] : memref<32x1024xf32, #tpu.memory_space<vmem>>, vector<32x256xf32>
    tpu.vector_store %arg11[%c0_23, %c256_24], %45 {strides = array<i32>} : memref<32x1024xf32, #tpu.memory_space<vmem>>, vector<32x256xf32>,
    %c2_i32 = arith.constant 2 : i32
    %47 = arith.addi %0, %c2_i32 : i32
    %48 = arith.index_cast %47 : i32 to index
    %49 = memref.load %arg1[%48] : memref<8xf32, #tpu.memory_space<smem>>
    %c2_i32_25 = arith.constant 2 : i32
    %50 = arith.addi %0, %c2_i32_25 : i32
    %51 = arith.index_cast %50 : i32 to index
    %52 = memref.load %arg2[%51] : memref<8xf32, #tpu.memory_space<smem>>
    %c2 = arith.constant 2 : index
    %c0_26 = arith.constant 0 : index
    %c0_27 = arith.constant 0 : index
    %53 = vector.load %arg3[%c2, %c0_26, %c0_27] : memref<4x4x256xbf16, #tpu.memory_space<vmem>>, vector<1x4x256xbf16>
    %54 = vector.shape_cast %53 : vector<1x4x256xbf16> to vector<4x256xbf16>
    %55 = arith.extf %54 : vector<4x256xbf16> to vector<4x256xf32>
    %c2_28 = arith.constant 2 : index
    %c0_29 = arith.constant 0 : index
    %c0_30 = arith.constant 0 : index
    %56 = vector.load %arg4[%c2_28, %c0_29, %c0_30] : memref<4x4x256xbf16, #tpu.memory_space<vmem>>, vector<1x4x256xbf16>
    %57 = vector.shape_cast %56 : vector<1x4x256xbf16> to vector<4x256xbf16>
    %58 = arith.extf %57 : vector<4x256xbf16> to vector<4x256xf32>
    %59 = vector.broadcast %49 : f32 to vector<4x256xf32>
    %60 = arith.mulf %59, %55 : vector<4x256xf32>
    %61 = vector.broadcast %52 : f32 to vector<4x256xf32>
    %62 = arith.mulf %61, %58 : vector<4x256xf32>
    %63 = arith.addf %60, %62 : vector<4x256xf32>
    %c0_31 = arith.constant 0 : index
    %c512 = arith.constant 512 : index
    %64 = vector.load %arg10[%c0_31, %c512] : memref<4x1024xf32, #tpu.memory_space<vmem>>, vector<4x256xf32>
    tpu.vector_store %arg10[%c0_31, %c512], %63 {strides = array<i32>} : memref<4x1024xf32, #tpu.memory_space<vmem>>, vector<4x256xf32>,
    %c2_32 = arith.constant 2 : index
    %c0_33 = arith.constant 0 : index
    %c0_34 = arith.constant 0 : index
    %65 = vector.load %arg5[%c2_32, %c0_33, %c0_34] : memref<4x32x1xf32, #tpu.memory_space<vmem>>, vector<1x32x1xf32>
    %66 = vector.shape_cast %65 : vector<1x32x1xf32> to vector<32x1xf32>
    %67 = vector.shape_cast %66 : vector<32x1xf32> to vector<32x1xf32>
    %68 = vector.broadcast %67 : vector<32x1xf32> to vector<32x256xf32>
    %c0_35 = arith.constant 0 : index
    %c512_36 = arith.constant 512 : index
    %69 = vector.load %arg11[%c0_35, %c512_36] : memref<32x1024xf32, #tpu.memory_space<vmem>>, vector<32x256xf32>
    tpu.vector_store %arg11[%c0_35, %c512_36], %68 {strides = array<i32>} : memref<32x1024xf32, #tpu.memory_space<vmem>>, vector<32x256xf32>,
    %c3_i32 = arith.constant 3 : i32
    %70 = arith.addi %0, %c3_i32 : i32
    %71 = arith.index_cast %70 : i32 to index
    %72 = memref.load %arg1[%71] : memref<8xf32, #tpu.memory_space<smem>>
    %c3_i32_37 = arith.constant 3 : i32
    %73 = arith.addi %0, %c3_i32_37 : i32
    %74 = arith.index_cast %73 : i32 to index
    %75 = memref.load %arg2[%74] : memref<8xf32, #tpu.memory_space<smem>>
    %c3 = arith.constant 3 : index
    %c0_38 = arith.constant 0 : index
    %c0_39 = arith.constant 0 : index
    %76 = vector.load %arg3[%c3, %c0_38, %c0_39] : memref<4x4x256xbf16, #tpu.memory_space<vmem>>, vector<1x4x256xbf16>
    %77 = vector.shape_cast %76 : vector<1x4x256xbf16> to vector<4x256xbf16>
    %78 = arith.extf %77 : vector<4x256xbf16> to vector<4x256xf32>
    %c3_40 = arith.constant 3 : index
    %c0_41 = arith.constant 0 : index
    %c0_42 = arith.constant 0 : index
    %79 = vector.load %arg4[%c3_40, %c0_41, %c0_42] : memref<4x4x256xbf16, #tpu.memory_space<vmem>>, vector<1x4x256xbf16>
    %80 = vector.shape_cast %79 : vector<1x4x256xbf16> to vector<4x256xbf16>
    %81 = arith.extf %80 : vector<4x256xbf16> to vector<4x256xf32>
    %82 = vector.broadcast %72 : f32 to vector<4x256xf32>
    %83 = arith.mulf %82, %78 : vector<4x256xf32>
    %84 = vector.broadcast %75 : f32 to vector<4x256xf32>
    %85 = arith.mulf %84, %81 : vector<4x256xf32>
    %86 = arith.addf %83, %85 : vector<4x256xf32>
    %c0_43 = arith.constant 0 : index
    %c768 = arith.constant 768 : index
    %87 = vector.load %arg10[%c0_43, %c768] : memref<4x1024xf32, #tpu.memory_space<vmem>>, vector<4x256xf32>
    tpu.vector_store %arg10[%c0_43, %c768], %86 {strides = array<i32>} : memref<4x1024xf32, #tpu.memory_space<vmem>>, vector<4x256xf32>,
    %c3_44 = arith.constant 3 : index
    %c0_45 = arith.constant 0 : index
    %c0_46 = arith.constant 0 : index
    %88 = vector.load %arg5[%c3_44, %c0_45, %c0_46] : memref<4x32x1xf32, #tpu.memory_space<vmem>>, vector<1x32x1xf32>
    %89 = vector.shape_cast %88 : vector<1x32x1xf32> to vector<32x1xf32>
    %90 = vector.shape_cast %89 : vector<32x1xf32> to vector<32x1xf32>
    %91 = vector.broadcast %90 : vector<32x1xf32> to vector<32x256xf32>
    %c0_47 = arith.constant 0 : index
    %c768_48 = arith.constant 768 : index
    %92 = vector.load %arg11[%c0_47, %c768_48] : memref<32x1024xf32, #tpu.memory_space<vmem>>, vector<32x256xf32>
    tpu.vector_store %arg11[%c0_47, %c768_48], %91 {strides = array<i32>} : memref<32x1024xf32, #tpu.memory_space<vmem>>, vector<32x256xf32>,
    %c0_49 = arith.constant 0 : index
    %c0_50 = arith.constant 0 : index
    %93 = vector.load %arg11[%c0_49, %c0_50] : memref<32x1024xf32, #tpu.memory_space<vmem>>, vector<32x1024xf32>
    %c0_51 = arith.constant 0 : index
    %c0_52 = arith.constant 0 : index
    %94 = vector.load %arg6[%c0_51, %c0_52] : memref<32x4xf32, #tpu.memory_space<vmem>>, vector<32x4xf32>
    %c0_53 = arith.constant 0 : index
    %c0_54 = arith.constant 0 : index
    %95 = vector.load %arg10[%c0_53, %c0_54] : memref<4x1024xf32, #tpu.memory_space<vmem>>, vector<4x1024xf32>
    %cst = arith.constant dense<0.000000e+00> : vector<32x1024xf32>
    %96 = tpu.matmul %94, %95, %cst {dimension_numbers = #tpu.dot_dimension_numbers<[1], [0], [0], [1], [0, 0, 1, 1], [], []>} : vector<32x4xf32>, vector<4x1024xf32>, vector<32x1024xf32> -> vector<32x1024xf32>
    %97 = arith.addf %93, %96 : vector<32x1024xf32>
    %c0_55 = arith.constant 0 : index
    %c0_56 = arith.constant 0 : index
    %98 = vector.load %arg11[%c0_55, %c0_56] : memref<32x1024xf32, #tpu.memory_space<vmem>>, vector<32x1024xf32>
    tpu.vector_store %arg11[%c0_55, %c0_56], %97 {strides = array<i32>} : memref<32x1024xf32, #tpu.memory_space<vmem>>, vector<32x1024xf32>,
    %c0_57 = arith.constant 0 : index
    %c0_58 = arith.constant 0 : index
    %99 = vector.load %arg7[%c0_57, %c0_58] : memref<4x32xf32, #tpu.memory_space<vmem>>, vector<4x32xf32>
    %c0_59 = arith.constant 0 : index
    %c0_60 = arith.constant 0 : index
    %100 = vector.load %arg11[%c0_59, %c0_60] : memref<32x1024xf32, #tpu.memory_space<vmem>>, vector<32x1024xf32>
    %cst_61 = arith.constant 0.000000e+00 : f32
    %101 = vector.broadcast %cst_61 : f32 to vector<32x1024xf32>
    %102 = arith.maximumf %100, %101 : vector<32x1024xf32>
    %cst_62 = arith.constant dense<0.000000e+00> : vector<4x1024xf32>
    %103 = tpu.matmul %99, %102, %cst_62 {dimension_numbers = #tpu.dot_dimension_numbers<[1], [0], [0], [1], [0, 0, 1, 1], [], []>} : vector<4x32xf32>, vector<32x1024xf32>, vector<4x1024xf32> -> vector<4x1024xf32>
    %c0_63 = arith.constant 0 : index
    %c0_64 = arith.constant 0 : index
    %104 = vector.load %arg8[%c0_63, %c0_64] : memref<4x1xf32, #tpu.memory_space<vmem>>, vector<4x1xf32>
    %105 = vector.broadcast %104 : vector<4x1xf32> to vector<4x1024xf32>
    %106 = arith.addf %103, %105 : vector<4x1024xf32>
    %107 = vector.extract_strided_slice %106 {offsets = [0, 0], sizes = [4, 256], strides = [1, 1]} : vector<4x1024xf32> to vector<4x256xf32>
    %c0_65 = arith.constant 0 : index
    %c0_66 = arith.constant 0 : index
    %c0_67 = arith.constant 0 : index
    %108 = vector.load %arg4[%c0_65, %c0_66, %c0_67] : memref<4x4x256xbf16, #tpu.memory_space<vmem>>, vector<1x4x256xbf16>
    %109 = vector.shape_cast %108 : vector<1x4x256xbf16> to vector<4x256xbf16>
    %110 = arith.extf %109 : vector<4x256xbf16> to vector<4x256xf32>
    %111 = arith.subf %107, %110 : vector<4x256xf32>
    %112 = arith.mulf %111, %111 : vector<4x256xf32>
    %c0_68 = arith.constant 0 : index
    %c0_69 = arith.constant 0 : index
    %c0_70 = arith.constant 0 : index
    %113 = vector.load %arg9[%c0_68, %c0_69, %c0_70] : memref<4x4x256xf32, #tpu.memory_space<vmem>>, vector<1x4x256xf32>
    %114 = vector.shape_cast %113 : vector<1x4x256xf32> to vector<4x256xf32>
    %115 = vector.shape_cast %112 : vector<4x256xf32> to vector<1x4x256xf32>
    tpu.vector_store %arg9[%c0_68, %c0_69, %c0_70], %115 {strides = array<i32>} : memref<4x4x256xf32, #tpu.memory_space<vmem>>, vector<1x4x256xf32>,
    %116 = vector.extract_strided_slice %106 {offsets = [0, 256], sizes = [4, 256], strides = [1, 1]} : vector<4x1024xf32> to vector<4x256xf32>
    %c1_71 = arith.constant 1 : index
    %c0_72 = arith.constant 0 : index
    %c0_73 = arith.constant 0 : index
    %117 = vector.load %arg4[%c1_71, %c0_72, %c0_73] : memref<4x4x256xbf16, #tpu.memory_space<vmem>>, vector<1x4x256xbf16>
    %118 = vector.shape_cast %117 : vector<1x4x256xbf16> to vector<4x256xbf16>
    %119 = arith.extf %118 : vector<4x256xbf16> to vector<4x256xf32>
    %120 = arith.subf %116, %119 : vector<4x256xf32>
    %121 = arith.mulf %120, %120 : vector<4x256xf32>
    %c1_74 = arith.constant 1 : index
    %c0_75 = arith.constant 0 : index
    %c0_76 = arith.constant 0 : index
    %122 = vector.load %arg9[%c1_74, %c0_75, %c0_76] : memref<4x4x256xf32, #tpu.memory_space<vmem>>, vector<1x4x256xf32>
    %123 = vector.shape_cast %122 : vector<1x4x256xf32> to vector<4x256xf32>
    %124 = vector.shape_cast %121 : vector<4x256xf32> to vector<1x4x256xf32>
    tpu.vector_store %arg9[%c1_74, %c0_75, %c0_76], %124 {strides = array<i32>} : memref<4x4x256xf32, #tpu.memory_space<vmem>>, vector<1x4x256xf32>,
    %125 = vector.extract_strided_slice %106 {offsets = [0, 512], sizes = [4, 256], strides = [1, 1]} : vector<4x1024xf32> to vector<4x256xf32>
    %c2_77 = arith.constant 2 : index
    %c0_78 = arith.constant 0 : index
    %c0_79 = arith.constant 0 : index
    %126 = vector.load %arg4[%c2_77, %c0_78, %c0_79] : memref<4x4x256xbf16, #tpu.memory_space<vmem>>, vector<1x4x256xbf16>
    %127 = vector.shape_cast %126 : vector<1x4x256xbf16> to vector<4x256xbf16>
    %128 = arith.extf %127 : vector<4x256xbf16> to vector<4x256xf32>
    %129 = arith.subf %125, %128 : vector<4x256xf32>
    %130 = arith.mulf %129, %129 : vector<4x256xf32>
    %c2_80 = arith.constant 2 : index
    %c0_81 = arith.constant 0 : index
    %c0_82 = arith.constant 0 : index
    %131 = vector.load %arg9[%c2_80, %c0_81, %c0_82] : memref<4x4x256xf32, #tpu.memory_space<vmem>>, vector<1x4x256xf32>
    %132 = vector.shape_cast %131 : vector<1x4x256xf32> to vector<4x256xf32>
    %133 = vector.shape_cast %130 : vector<4x256xf32> to vector<1x4x256xf32>
    tpu.vector_store %arg9[%c2_80, %c0_81, %c0_82], %133 {strides = array<i32>} : memref<4x4x256xf32, #tpu.memory_space<vmem>>, vector<1x4x256xf32>,
    %134 = vector.extract_strided_slice %106 {offsets = [0, 768], sizes = [4, 256], strides = [1, 1]} : vector<4x1024xf32> to vector<4x256xf32>
    %c3_83 = arith.constant 3 : index
    %c0_84 = arith.constant 0 : index
    %c0_85 = arith.constant 0 : index
    %135 = vector.load %arg4[%c3_83, %c0_84, %c0_85] : memref<4x4x256xbf16, #tpu.memory_space<vmem>>, vector<1x4x256xbf16>
    %136 = vector.shape_cast %135 : vector<1x4x256xbf16> to vector<4x256xbf16>
    %137 = arith.extf %136 : vector<4x256xbf16> to vector<4x256xf32>
    %138 = arith.subf %134, %137 : vector<4x256xf32>
    %139 = arith.mulf %138, %138 : vector<4x256xf32>
    %c3_86 = arith.constant 3 : index
    %c0_87 = arith.constant 0 : index
    %c0_88 = arith.constant 0 : index
    %140 = vector.load %arg9[%c3_86, %c0_87, %c0_88] : memref<4x4x256xf32, #tpu.memory_space<vmem>>, vector<1x4x256xf32>
    %141 = vector.shape_cast %140 : vector<1x4x256xf32> to vector<4x256xf32>
    %142 = vector.shape_cast %139 : vector<4x256xf32> to vector<1x4x256xf32>
    tpu.vector_store %arg9[%c3_86, %c0_87, %c0_88], %142 {strides = array<i32>} : memref<4x4x256xf32, #tpu.memory_space<vmem>>, vector<1x4x256xf32>,
    return
  }
  func.func @transform_0(%arg0: i32) -> i32 {
    %c0_i32 = arith.constant 0 : i32
    %c0_i32_0 = arith.constant 0 : i32
    return %c0_i32 : i32
  }
  func.func @transform_1(%arg0: i32) -> i32 {
    %c0_i32 = arith.constant 0 : i32
    %c0_i32_0 = arith.constant 0 : i32
    return %c0_i32 : i32
  }
  func.func @transform_2(%arg0: i32) -> (i32, i32, i32) {
    %c0_i32 = arith.constant 0 : i32
    %c0_i32_0 = arith.constant 0 : i32
    %c0_i32_1 = arith.constant 0 : i32
    return %arg0, %c0_i32, %c0_i32_0 : i32, i32, i32
  }
  func.func @transform_3(%arg0: i32) -> (i32, i32, i32) {
    %c0_i32 = arith.constant 0 : i32
    %c0_i32_0 = arith.constant 0 : i32
    %c0_i32_1 = arith.constant 0 : i32
    return %arg0, %c0_i32, %c0_i32_0 : i32, i32, i32
  }
  func.func @transform_4(%arg0: i32) -> (i32, i32, i32) {
    %c0_i32 = arith.constant 0 : i32
    %c0_i32_0 = arith.constant 0 : i32
    %c0_i32_1 = arith.constant 0 : i32
    return %arg0, %c0_i32, %c0_i32_0 : i32, i32, i32
  }
  func.func @transform_5(%arg0: i32) -> (i32, i32) {
    %c0_i32 = arith.constant 0 : i32
    %c0_i32_0 = arith.constant 0 : i32
    %c0_i32_1 = arith.constant 0 : i32
    return %c0_i32, %c0_i32_0 : i32, i32
  }
  func.func @transform_6(%arg0: i32) -> (i32, i32) {
    %c0_i32 = arith.constant 0 : i32
    %c0_i32_0 = arith.constant 0 : i32
    %c0_i32_1 = arith.constant 0 : i32
    return %c0_i32, %c0_i32_0 : i32, i32
  }
  func.func @transform_7(%arg0: i32) -> (i32, i32) {
    %c0_i32 = arith.constant 0 : i32
    %c0_i32_0 = arith.constant 0 : i32
    %c0_i32_1 = arith.constant 0 : i32
    return %c0_i32, %c0_i32_0 : i32, i32
  }
  func.func @transform_8(%arg0: i32) -> (i32, i32, i32) {
    %c0_i32 = arith.constant 0 : i32
    %c0_i32_0 = arith.constant 0 : i32
    %c0_i32_1 = arith.constant 0 : i32
    return %arg0, %c0_i32, %c0_i32_0 : i32, i32, i32
  }
}

</mosaic_0001>

<llo_original>
// kernel: tpu_custom_call.1
$region0: #{tpu_custom_call.1}
  #allocation0 [shape = 'u32[]', space=smem, size = 0x4, offset = 0x4, fixed_abs, tag = 'smem constant byte address 0x4 - core index']
  #allocation1 [shape = 'u32[144,128]{1,0:T(1,128)}', space=vmem, size = 0x12000, scoped, tag = 'internal scratch']
  #allocation2 [shape = 'f32[4,1024]{1,0:T(4,128)}', space=vmem, size = 0x4000, scoped, tag = 'scratch operand']
  #allocation3 [shape = 'f32[32,1024]{1,0:T(8,128)}', space=vmem, size = 0x20000, scoped, tag = 'scratch operand']
  %s0 = inlined_call_operand.vmem [shape: f32[8], index: 0, kind: input, shape index: {}]
  %s1 = inlined_call_operand.vmem [shape: f32[8], index: 1, kind: input, shape index: {}]
  %s2 = inlined_call_operand.vmem [shape: bf16[8,4,256], index: 2, kind: input, shape index: {}]
  %s3 = inlined_call_operand.vmem [shape: bf16[8,4,256], index: 3, kind: input, shape index: {}]
  %s4 = inlined_call_operand.vmem [shape: f32[8,32,1], index: 4, kind: input, shape index: {}]
  %s5 = inlined_call_operand.vmem [shape: f32[32,4], index: 5, kind: input, shape index: {}]
  %s6 = inlined_call_operand.vmem [shape: f32[4,32], index: 6, kind: input, shape index: {}]
  %s7 = inlined_call_operand.vmem [shape: f32[4,1], index: 7, kind: input, shape index: {}]
  %s8 = inlined_call_operand.hbm [shape: f32[8,4,256], index: 8, kind: output, shape index: {}]
  %s9 = sld [smem:[#allocation0]]
  $region73: #{tpu_custom_call.1} parent=0
    _
  %s11 = ssub.s32 1, %s9
  %s12 = scalar_select 0, %s11, %s9
  $region1: #{tpu_custom_call.1} parent=0
    #allocation4 [shape = 'u8[512]{0}', space=smem, size = 0x200, scoped, tag = 'input window, operand 0, single buffered']
    #allocation5 [shape = 's32[2]{0}', space=sflag, size = 0x8, scoped, tag = 'scoped memory for tpu_custom_call.1']
    #allocation6 [shape = 's32[2]{0}', space=sflag, size = 0x8, scoped, tag = 'scoped memory for tpu_custom_call.1']
    #allocation7 [shape = 'u8[512]{0}', space=smem, size = 0x200, scoped, tag = 'input window, operand 1, single buffered']
    #allocation8 [shape = 's32[1]{0}', space=sflag, size = 0x4, scoped, tag = 'scoped memory for tpu_custom_call.1']
    #allocation9 [shape = 'u8[32768]{0}', space=vmem, size = 0x8000, scoped, tag = 'output window, operand 0']
    %13 = vsyncpa [#allocation6], 0
    %14 = vsyncpa [#allocation8], 0
    %15 = vsyncpa [#allocation5], 0
    %s16 = scalar_lea.sflag [#allocation5], 1
    %17 = vsyncpa %s16, 0
    loop: start=0, step=1, limit=4
    $region2: #{tpu_custom_call.1} parent=1 // loop_pre_header
      _
    $region3: #{tpu_custom_call.1} parent=1 // loop_header
      %s19 = sphi 0, %s23
      %p20 = scmp.ge.s32.totalorder %s19, 4
      %s27 = sphi 0, %s27
      %s29 = sphi 0, %s27
      %s30 = sphi 0, %s29
      %s44 = sphi 0, %s30
      %s48 = sphi 0, %s48
      %s50 = sphi 0, %s48
      %s51 = sphi 0, %s50
      %s65 = sphi 0, %s51
      %s71 = sphi 0, %s73
      %s74 = sphi 0, %s71
      %s75 = sphi 0, %s74
      %s91 = sphi 0, %s75
      %s97 = sphi 0, %s99
      %s100 = sphi 0, %s97
      %s101 = sphi 0, %s100
      %s117 = sphi 0, %s101
      %s123 = sphi 0, %s125
      %s126 = sphi 0, %s123
      %s127 = sphi 0, %s126
      %s143 = sphi 0, %s127
      %s147 = sphi 0, %s147
      %s149 = sphi 0, %s147
      %s150 = sphi 0, %s149
      %s164 = sphi 0, %s150
      %s168 = sphi 0, %s168
      %s170 = sphi 0, %s168
      %s171 = sphi 0, %s170
      %s185 = sphi 0, %s171
      %s189 = sphi 0, %s189
      %s191 = sphi 0, %s189
      %s192 = sphi 0, %s191
      %s206 = sphi 0, %s192
      %s212 = sphi 0, %s214
      %s215 = sphi 0, %s212
      %s216 = sphi 0, %s215
      %s232 = sphi 0, %s216
    $region4: #{tpu_custom_call.1} parent=1 // loop_header_branch
      %22 = sbr.rel (%p20) target = $region8
    $region5: #{tpu_custom_call.1} parent=1 // loop_body
      %s24 = ssub.s32 %s19, 1
      %s25 = ssub.s32 %s19, 2
      %s26 = sadd.s32 %s19, 1
      %s28 = sadd.s32 %s27, 1
      %p31 = scmp.eq.s32.totalorder %s19, 1
      %p32 = scmp.ne.s32.totalorder %s27, %s29
      %p33 = scmp.eq.s32.totalorder %s19, 0
      %p34 = por %p32, %p33
      %p35 = scmp.ne.s32.totalorder %s27, %s29
      %p36 = scmp.eq.s32.totalorder %s24, 1
      %p37 = por %p35, %p36
      %p38 = scmp.ne.s32.totalorder %s29, %s30
      %p39 = scmp.eq.s32.totalorder %s24, 0
      %p40 = por %p38, %p39
      %p41 = scmp.ne.s32.totalorder %s29, %s30
      %p42 = scmp.eq.s32.totalorder %s25, 1
      %p43 = por %p41, %p42
      %p45 = scmp.ne.s32.totalorder %s30, %s44
      %p46 = scmp.eq.s32.totalorder %s25, 0
      %p47 = por %p45, %p46
      %s49 = sadd.s32 %s48, 1
      %p52 = scmp.eq.s32.totalorder %s19, 1
      %p53 = scmp.ne.s32.totalorder %s48, %s50
      %p54 = scmp.eq.s32.totalorder %s19, 0
      %p55 = por %p53, %p54
      %p56 = scmp.ne.s32.totalorder %s48, %s50
      %p57 = scmp.eq.s32.totalorder %s24, 1
      %p58 = por %p56, %p57
      %p59 = scmp.ne.s32.totalorder %s50, %s51
      %p60 = scmp.eq.s32.totalorder %s24, 0
      %p61 = por %p59, %p60
      %p62 = scmp.ne.s32.totalorder %s50, %s51
      %p63 = scmp.eq.s32.totalorder %s25, 1
      %p64 = por %p62, %p63
      %p66 = scmp.ne.s32.totalorder %s51, %s65
      %p67 = scmp.eq.s32.totalorder %s25, 0
      %p68 = por %p66, %p67
      %s69 = ssub.s32 %s19, %s26
      %p70 = scmp.eq.s32.totalorder %s69, 0
      %s72 = sadd.s32 %s71, 1
      %s73 = scalar_select %p70, %s71, %s72
      %p76 = pneg %p70
      %p77 = scmp.eq.s32.totalorder %s19, 1
      %p78 = por %p76, %p77
      %p79 = scmp.ne.s32.totalorder %s71, %s74
      %p80 = scmp.eq.s32.totalorder %s19, 0
      %p81 = por %p79, %p80
      %p82 = scmp.ne.s32.totalorder %s71, %s74
      %p83 = scmp.eq.s32.totalorder %s24, 1
      %p84 = por %p82, %p83
      %p85 = scmp.ne.s32.totalorder %s74, %s75
      %p86 = scmp.eq.s32.totalorder %s24, 0
      %p87 = por %p85, %p86
      %p88 = scmp.ne.s32.totalorder %s74, %s75
      %p89 = scmp.eq.s32.totalorder %s25, 1
      %p90 = por %p88, %p89
      %p92 = scmp.ne.s32.totalorder %s75, %s91
      %p93 = scmp.eq.s32.totalorder %s25, 0
      %p94 = por %p92, %p93
      %s95 = ssub.s32 %s19, %s26
      %p96 = scmp.eq.s32.totalorder %s95, 0
      %s98 = sadd.s32 %s97, 1
      %s99 = scalar_select %p96, %s97, %s98
      %p102 = pneg %p96
      %p103 = scmp.eq.s32.totalorder %s19, 1
      %p104 = por %p102, %p103
      %p105 = scmp.ne.s32.totalorder %s97, %s100
      %p106 = scmp.eq.s32.totalorder %s19, 0
      %p107 = por %p105, %p106
      %p108 = scmp.ne.s32.totalorder %s97, %s100
      %p109 = scmp.eq.s32.totalorder %s24, 1
      %p110 = por %p108, %p109
      %p111 = scmp.ne.s32.totalorder %s100, %s101
      %p112 = scmp.eq.s32.totalorder %s24, 0
      %p113 = por %p111, %p112
      %p114 = scmp.ne.s32.totalorder %s100, %s101
      %p115 = scmp.eq.s32.totalorder %s25, 1
      %p116 = por %p114, %p115
      %p118 = scmp.ne.s32.totalorder %s101, %s117
      %p119 = scmp.eq.s32.totalorder %s25, 0
      %p120 = por %p118, %p119
      %s121 = ssub.s32 %s19, %s26
      %p122 = scmp.eq.s32.totalorder %s121, 0
      %s124 = sadd.s32 %s123, 1
      %s125 = scalar_select %p122, %s123, %s124
      %p128 = pneg %p122
      %p129 = scmp.eq.s32.totalorder %s19, 1
      %p130 = por %p128, %p129
      %p131 = scmp.ne.s32.totalorder %s123, %s126
      %p132 = scmp.eq.s32.totalorder %s19, 0
      %p133 = por %p131, %p132
      %p134 = scmp.ne.s32.totalorder %s123, %s126
      %p135 = scmp.eq.s32.totalorder %s24, 1
      %p136 = por %p134, %p135
      %p137 = scmp.ne.s32.totalorder %s126, %s127
      %p138 = scmp.eq.s32.totalorder %s24, 0
      %p139 = por %p137, %p138
      %p140 = scmp.ne.s32.totalorder %s126, %s127
      %p141 = scmp.eq.s32.totalorder %s25, 1
      %p142 = por %p140, %p141
      %p144 = scmp.ne.s32.totalorder %s127, %s143
      %p145 = scmp.eq.s32.totalorder %s25, 0
      %p146 = por %p144, %p145
      %s148 = sadd.s32 %s147, 1
      %p151 = scmp.eq.s32.totalorder %s19, 1
      %p152 = scmp.ne.s32.totalorder %s147, %s149
      %p153 = scmp.eq.s32.totalorder %s19, 0
      %p154 = por %p152, %p153
      %p155 = scmp.ne.s32.totalorder %s147, %s149
      %p156 = scmp.eq.s32.totalorder %s24, 1
      %p157 = por %p155, %p156
      %p158 = scmp.ne.s32.totalorder %s149, %s150
      %p159 = scmp.eq.s32.totalorder %s24, 0
      %p160 = por %p158, %p159
      %p161 = scmp.ne.s32.totalorder %s149, %s150
      %p162 = scmp.eq.s32.totalorder %s25, 1
      %p163 = por %p161, %p162
      %p165 = scmp.ne.s32.totalorder %s150, %s164
      %p166 = scmp.eq.s32.totalorder %s25, 0
      %p167 = por %p165, %p166
      %s169 = sadd.s32 %s168, 1
      %p172 = scmp.eq.s32.totalorder %s19, 1
      %p173 = scmp.ne.s32.totalorder %s168, %s170
      %p174 = scmp.eq.s32.totalorder %s19, 0
      %p175 = por %p173, %p174
      %p176 = scmp.ne.s32.totalorder %s168, %s170
      %p177 = scmp.eq.s32.totalorder %s24, 1
      %p178 = por %p176, %p177
      %p179 = scmp.ne.s32.totalorder %s170, %s171
      %p180 = scmp.eq.s32.totalorder %s24, 0
      %p181 = por %p179, %p180
      %p182 = scmp.ne.s32.totalorder %s170, %s171
      %p183 = scmp.eq.s32.totalorder %s25, 1
      %p184 = por %p182, %p183
      %p186 = scmp.ne.s32.totalorder %s171, %s185
      %p187 = scmp.eq.s32.totalorder %s25, 0
      %p188 = por %p186, %p187
      %s190 = sadd.s32 %s189, 1
      %p193 = scmp.eq.s32.totalorder %s19, 1
      %p194 = scmp.ne.s32.totalorder %s189, %s191
      %p195 = scmp.eq.s32.totalorder %s19, 0
      %p196 = por %p194, %p195
      %p197 = scmp.ne.s32.totalorder %s189, %s191
      %p198 = scmp.eq.s32.totalorder %s24, 1
      %p199 = por %p197, %p198
      %p200 = scmp.ne.s32.totalorder %s191, %s192
      %p201 = scmp.eq.s32.totalorder %s24, 0
      %p202 = por %p200, %p201
      %p203 = scmp.ne.s32.totalorder %s191, %s192
      %p204 = scmp.eq.s32.totalorder %s25, 1
      %p205 = por %p203, %p204
      %p207 = scmp.ne.s32.totalorder %s192, %s206
      %p208 = scmp.eq.s32.totalorder %s25, 0
      %p209 = por %p207, %p208
      %s210 = ssub.s32 %s19, %s26
      %p211 = scmp.eq.s32.totalorder %s210, 0
      %s213 = sadd.s32 %s212, 1
      %s214 = scalar_select %p211, %s212, %s213
      %p217 = pneg %p211
      %p218 = scmp.eq.s32.totalorder %s19, 1
      %p219 = por %p217, %p218
      %p220 = scmp.ne.s32.totalorder %s212, %s215
      %p221 = scmp.eq.s32.totalorder %s19, 0
      %p222 = por %p220, %p221
      %p223 = scmp.ne.s32.totalorder %s212, %s215
      %p224 = scmp.eq.s32.totalorder %s24, 1
      %p225 = por %p223, %p224
      %p226 = scmp.ne.s32.totalorder %s215, %s216
      %p227 = scmp.eq.s32.totalorder %s24, 0
      %p228 = por %p226, %p227
      %p229 = scmp.ne.s32.totalorder %s215, %s216
      %p230 = scmp.eq.s32.totalorder %s25, 1
      %p231 = por %p229, %p230
      %p233 = scmp.ne.s32.totalorder %s216, %s232
      %p234 = scmp.eq.s32.totalorder %s25, 0
      %p235 = por %p233, %p234
      %p236 = scmp.le.s32.totalorder 1, %s19
      %p237 = scmp.lt.s32.totalorder %s19, 3
      %p238 = pnand %p236, %p237
      %p239 = pneg %p238
      // Predicated region
      $region9: #{tpu_custom_call.1} parent=5 // pred_check
        _
      $region10: #{tpu_custom_call.1} parent=5 // pred_check_branch
        %241 = sbr.rel (%p238) target = $region12
      $region11: #{tpu_custom_call.1} parent=5 // pred_region
        %s242 = ssub.s32 %s19, 1
        // Predicated region
        $region13: #{tpu_custom_call.1} parent=11 // pred_check
          %p243 = pneg %p40
        $region14: #{tpu_custom_call.1} parent=11 // pred_check_branch
          %245 = sbr.rel (%p243) target = $region16
        $region15: #{tpu_custom_call.1} parent=11 // pred_region
          %s247 = ssub.s32 16, 16
          %248 = vsyncadd [#allocation6], %s247
          %s250 = sshll.u32 %s0, 4
          %s251 = int_to_ptr.vmem [resolvable:$true] %s250
          %253 = dma.vmem_to_smem %s251, 16, [#allocation4], [#allocation6]
        $region16: #{tpu_custom_call.1} parent=11 // pred_fallthru
          _
        // Predicated region
        $region17: #{tpu_custom_call.1} parent=11 // pred_check
          %p254 = pneg %p61
        $region18: #{tpu_custom_call.1} parent=11 // pred_check_branch
          %256 = sbr.rel (%p254) target = $region20
        $region19: #{tpu_custom_call.1} parent=11 // pred_region
          %s258 = ssub.s32 16, 16
          %259 = vsyncadd [#allocation8], %s258
          %s261 = sshll.u32 %s1, 4
          %s262 = int_to_ptr.vmem [resolvable:$true] %s261
          %264 = dma.vmem_to_smem %s262, 16, [#allocation7], [#allocation8]
        $region20: #{tpu_custom_call.1} parent=11 // pred_fallthru
          _
        // Predicated region
        $region21: #{tpu_custom_call.1} parent=11 // pred_check
          %p265 = pneg %p160
        $region22: #{tpu_custom_call.1} parent=11 // pred_check_branch
          %267 = sbr.rel (%p265) target = $region24
        $region23: #{tpu_custom_call.1} parent=11 // pred_region
          _
        $region24: #{tpu_custom_call.1} parent=11 // pred_fallthru
          _
        // Predicated region
        $region25: #{tpu_custom_call.1} parent=11 // pred_check
          %p268 = pneg %p181
        $region26: #{tpu_custom_call.1} parent=11 // pred_check_branch
          %270 = sbr.rel (%p268) target = $region28
        $region27: #{tpu_custom_call.1} parent=11 // pred_region
          _
        $region28: #{tpu_custom_call.1} parent=11 // pred_fallthru
          _
        // Predicated region
        $region29: #{tpu_custom_call.1} parent=11 // pred_check
          %p271 = pneg %p202
        $region30: #{tpu_custom_call.1} parent=11 // pred_check_branch
          %273 = sbr.rel (%p271) target = $region32
        $region31: #{tpu_custom_call.1} parent=11 // pred_region
          _
        $region32: #{tpu_custom_call.1} parent=11 // pred_fallthru
          _
      $region12: #{tpu_custom_call.1} parent=5 // pred_fallthru
        _
      %p274 = scmp.lt.s32.totalorder %s19, 2
      // Predicated region
      $region33: #{tpu_custom_call.1} parent=5 // pred_check
        %p275 = pneg %p274
      $region34: #{tpu_custom_call.1} parent=5 // pred_check_branch
        %277 = sbr.rel (%p275) target = $region36
      $region35: #{tpu_custom_call.1} parent=5 // pred_region
        // Predicated region
        $region37: #{tpu_custom_call.1} parent=35 // pred_check
          %p278 = pneg %p81
        $region38: #{tpu_custom_call.1} parent=35 // pred_check_branch
          %280 = sbr.rel (%p278) target = $region40
        $region39: #{tpu_custom_call.1} parent=35 // pred_region
          %s281 = smul.u32 4, %s19
          %p282 = scmp.lt.s32.totalorder %s281, 7
          %s283 = scalar_select %p282, %s281, 7
          %s284 = smul.addr %s283, 2
          %s285 = smul.addr %s284, 2
          %s286 = scalar_lea.vmem %s2, %s285
          %s287 = smul.u32 4, %s19
        $region40: #{tpu_custom_call.1} parent=35 // pred_fallthru
          _
        // Predicated region
        $region41: #{tpu_custom_call.1} parent=35 // pred_check
          %p288 = pneg %p107
        $region42: #{tpu_custom_call.1} parent=35 // pred_check_branch
          %290 = sbr.rel (%p288) target = $region44
        $region43: #{tpu_custom_call.1} parent=35 // pred_region
          %s291 = smul.u32 4, %s19
          %p292 = scmp.lt.s32.totalorder %s291, 7
          %s293 = scalar_select %p292, %s291, 7
          %s294 = smul.addr %s293, 2
          %s295 = smul.addr %s294, 2
          %s296 = scalar_lea.vmem %s3, %s295
          %s297 = smul.u32 4, %s19
        $region44: #{tpu_custom_call.1} parent=35 // pred_fallthru
          _
        // Predicated region
        $region45: #{tpu_custom_call.1} parent=35 // pred_check
          %p298 = pneg %p133
        $region46: #{tpu_custom_call.1} parent=35 // pred_check_branch
          %300 = sbr.rel (%p298) target = $region48
        $region47: #{tpu_custom_call.1} parent=35 // pred_region
          %s301 = smul.u32 4, %s19
          %p302 = scmp.lt.s32.totalorder %s301, 7
          %s303 = scalar_select %p302, %s301, 7
          %s304 = smul.addr %s303, 4
          %s305 = smul.addr %s304, 8
          %s306 = scalar_lea.vmem %s4, %s305
          %s307 = smul.u32 4, %s19
        $region48: #{tpu_custom_call.1} parent=35 // pred_fallthru
          _
      $region36: #{tpu_custom_call.1} parent=5 // pred_fallthru
        _
      %p308 = scmp.le.s32.totalorder 1, %s19
      %p309 = scmp.lt.s32.totalorder %s19, 3
      %p310 = pnand %p308, %p309
      %p311 = pneg %p310
      // Predicated region
      $region49: #{tpu_custom_call.1} parent=5 // pred_check
        _
      $region50: #{tpu_custom_call.1} parent=5 // pred_check_branch
        %313 = sbr.rel (%p310) target = $region52
      $region51: #{tpu_custom_call.1} parent=5 // pred_region
        %s314 = ssub.s32 %s19, 1
        // Predicated region
        $region53: #{tpu_custom_call.1} parent=51 // pred_check
          %p315 = pneg %p40
        $region54: #{tpu_custom_call.1} parent=51 // pred_check_branch
          %317 = sbr.rel (%p315) target = $region56
        $region55: #{tpu_custom_call.1} parent=51 // pred_region
          %318 = dma.done [#allocation6], 16
        $region56: #{tpu_custom_call.1} parent=51 // pred_fallthru
          _
        // Predicated region
        $region57: #{tpu_custom_call.1} parent=51 // pred_check
          %p319 = pneg %p61
        $region58: #{tpu_custom_call.1} parent=51 // pred_check_branch
          %321 = sbr.rel (%p319) target = $region60
        $region59: #{tpu_custom_call.1} parent=51 // pred_region
          %322 = dma.done [#allocation8], 16
        $region60: #{tpu_custom_call.1} parent=51 // pred_fallthru
          _
        %323 = sfence
        %p324 = pneg %p40
        %p325 = pneg %p37
        %p326 = pneg %p61
        %p327 = pneg %p58
        %s328 = smul.u32 4, %s24
        %p329 = scmp.lt.s32.totalorder %s328, 7
        %s330 = scalar_select %p329, %s328, 7
        %s331 = smul.addr %s330, 2
        %s332 = smul.addr %s331, 2
        %s333 = scalar_lea.vmem %s2, %s332
        %p334 = pneg %p87
        %p335 = pneg %p84
        %s336 = smul.u32 4, %s24
        %p337 = scmp.lt.s32.totalorder %s336, 7
        %s338 = scalar_select %p337, %s336, 7
        %s339 = smul.addr %s338, 2
        %s340 = smul.addr %s339, 2
        %s341 = scalar_lea.vmem %s3, %s340
        %p342 = pneg %p113
        %p343 = pneg %p110
        %s344 = smul.u32 4, %s24
        %p345 = scmp.lt.s32.totalorder %s344, 7
        %s346 = scalar_select %p345, %s344, 7
        %s347 = smul.addr %s346, 4
        %s348 = smul.addr %s347, 8
        %s349 = scalar_lea.vmem %s4, %s348
        %p350 = pneg %p139
        %p351 = pneg %p136
        %p352 = pneg %p160
        %p353 = pneg %p157
        %p354 = pneg %p181
        %p355 = pneg %p178
        %p356 = pneg %p202
        %p357 = pneg %p199
        %p358 = pneg %p228
        %p359 = pneg %p225
        %s360 = sand.u32 %s215, 1
        %s361 = scalar_lea.sflag [#allocation5], %s360
        %s362 = sand.u32 %s215, 1
        %s363 = smul.addr %s362, 32
        %s364 = scalar_lea.vmem [#allocation9], %s363
        %s365 = smul.u32 4, %s24
        %p366 = scmp.lt.s32.totalorder %s365, 7
        %s367 = scalar_select %p366, %s365, 7
        %s368 = smul.addr %s367, 2
        %s369 = smul.addr %s368, 2
        %s370 = scalar_lea.vmem %s2, %s369
        %s371 = smul.u32 4, %s24
        %s372 = smul.u32 4, %s24
        %p373 = scmp.lt.s32.totalorder %s372, 7
        %s374 = scalar_select %p373, %s372, 7
        %s375 = smul.addr %s374, 2
        %s376 = smul.addr %s375, 2
        %s377 = scalar_lea.vmem %s3, %s376
        %s378 = smul.u32 4, %s24
        %s379 = smul.u32 4, %s24
        %p380 = scmp.lt.s32.totalorder %s379, 7
        %s381 = scalar_select %p380, %s379, 7
        %s382 = smul.addr %s381, 4
        %s383 = smul.addr %s382, 8
        %s384 = scalar_lea.vmem %s4, %s383
        %s385 = smul.u32 4, %s24
        %s386 = smul.u32 4, %s24
        %s387 = smul.u32 %s24, 4
        %s388 = sld [smem:[#allocation4 + %s387]]
        %s389 = sld [smem:[#allocation7 + %s387]]
        %v390 = vld [vmem:[%s370] sm:$0xf]
        %v391 = vunpack.c.l.bf16 %v390
        %v392 = vld [vmem:[%s377] sm:$0xf]
        %v393 = vunpack.c.l.bf16 %v392
        %v394 = vstv %s388
        %v395 = vmul.f32 %v394, %v391
        %v396 = vstv %s389
        %v397 = vmul.f32 %v396, %v393
        %v398 = vadd.f32 %v395, %v397
        %399 = vst [vmem:[#allocation2] sm:$0xff] %v398
        %v400 = vld [vmem:[%s384] sm:$0xff]
        %v401 = vld [vmem:[%s384 + $0x8] sm:$0xff]
        %v402 = vld [vmem:[%s384 + $0x10] sm:$0xff]
        %v403 = vld [vmem:[%s384 + $0x18] sm:$0xff]
        %405 = vset.pattern.permute.xlu0 0
        %406 = vperm.xlu0 %405, %v400
        %v407 = vpop.permute.xlu0 %406
        %410 = vset.pattern.permute.xlu0 0
        %411 = vperm.xlu0 %410, %v401
        %v412 = vpop.permute.xlu0 %411
        %415 = vset.pattern.permute.xlu0 0
        %416 = vperm.xlu0 %415, %v402
        %v417 = vpop.permute.xlu0 %416
        %420 = vset.pattern.permute.xlu0 0
        %421 = vperm.xlu0 %420, %v403
        %v422 = vpop.permute.xlu0 %421
        %424 = vst [vmem:[#allocation3] sm:$0xff] %v407
        %425 = vst [vmem:[#allocation3 + $0x8] sm:$0xff] %v407
        %426 = vst [vmem:[#allocation3 + $0x40] sm:$0xff] %v412
        %427 = vst [vmem:[#allocation3 + $0x48] sm:$0xff] %v412
        %428 = vst [vmem:[#allocation3 + $0x80] sm:$0xff] %v417
        %429 = vst [vmem:[#allocation3 + $0x88] sm:$0xff] %v417
        %430 = vst [vmem:[#allocation3 + $0xc0] sm:$0xff] %v422
        %431 = vst [vmem:[#allocation3 + $0xc8] sm:$0xff] %v422
        %s432 = sadd.s32 %s387, 1
        %s433 = sld [smem:[#allocation4 + %s432]]
        %s434 = sld [smem:[#allocation7 + %s432]]
        %s435 = scalar_lea.vmem %s370, 4
        %v436 = vld [vmem:[%s435] sm:$0xf]
        %v437 = vunpack.c.l.bf16 %v436
        %s438 = scalar_lea.vmem %s377, 4
        %v439 = vld [vmem:[%s438] sm:$0xf]
        %v440 = vunpack.c.l.bf16 %v439
        %v441 = vstv %s433
        %v442 = vmul.f32 %v441, %v437
        %v443 = vstv %s434
        %v444 = vmul.f32 %v443, %v440
        %v445 = vadd.f32 %v442, %v444
        %446 = vst [vmem:[#allocation2 + $0x8] sm:$0xff] %v445
        %s447 = scalar_lea.vmem %s384, 32
        %v448 = vld [vmem:[%s447] sm:$0xff]
        %v449 = vld [vmem:[%s447 + $0x8] sm:$0xff]
        %v450 = vld [vmem:[%s447 + $0x10] sm:$0xff]
        %v451 = vld [vmem:[%s447 + $0x18] sm:$0xff]
        %453 = vset.pattern.permute.xlu0 0
        %454 = vperm.xlu0 %453, %v448
        %v455 = vpop.permute.xlu0 %454
        %458 = vset.pattern.permute.xlu0 0
        %459 = vperm.xlu0 %458, %v449
        %v460 = vpop.permute.xlu0 %459
        %463 = vset.pattern.permute.xlu0 0
        %464 = vperm.xlu0 %463, %v450
        %v465 = vpop.permute.xlu0 %464
        %468 = vset.pattern.permute.xlu0 0
        %469 = vperm.xlu0 %468, %v451
        %v470 = vpop.permute.xlu0 %469
        %472 = vst [vmem:[#allocation3 + $0x10] sm:$0xff] %v455
        %473 = vst [vmem:[#allocation3 + $0x18] sm:$0xff] %v455
        %474 = vst [vmem:[#allocation3 + $0x50] sm:$0xff] %v460
        %475 = vst [vmem:[#allocation3 + $0x58] sm:$0xff] %v460
        %476 = vst [vmem:[#allocation3 + $0x90] sm:$0xff] %v465
        %477 = vst [vmem:[#allocation3 + $0x98] sm:$0xff] %v465
        %478 = vst [vmem:[#allocation3 + $0xd0] sm:$0xff] %v470
        %479 = vst [vmem:[#allocation3 + $0xd8] sm:$0xff] %v470
        %s480 = sadd.s32 %s387, 2
        %s481 = sld [smem:[#allocation4 + %s480]]
        %s482 = sld [smem:[#allocation7 + %s480]]
        %s483 = scalar_lea.vmem %s370, 8
        %v484 = vld [vmem:[%s483] sm:$0xf]
        %v485 = vunpack.c.l.bf16 %v484
        %s486 = scalar_lea.vmem %s377, 8
        %v487 = vld [vmem:[%s486] sm:$0xf]
        %v488 = vunpack.c.l.bf16 %v487
        %v489 = vstv %s481
        %v490 = vmul.f32 %v489, %v485
        %v491 = vstv %s482
        %v492 = vmul.f32 %v491, %v488
        %v493 = vadd.f32 %v490, %v492
        %494 = vst [vmem:[#allocation2 + $0x10] sm:$0xff] %v493
        %s495 = scalar_lea.vmem %s384, 64
        %v496 = vld [vmem:[%s495] sm:$0xff]
        %v497 = vld [vmem:[%s495 + $0x8] sm:$0xff]
        %v498 = vld [vmem:[%s495 + $0x10] sm:$0xff]
        %v499 = vld [vmem:[%s495 + $0x18] sm:$0xff]
        %501 = vset.pattern.permute.xlu0 0
        %502 = vperm.xlu0 %501, %v496
        %v503 = vpop.permute.xlu0 %502
        %506 = vset.pattern.permute.xlu0 0
        %507 = vperm.xlu0 %506, %v497
        %v508 = vpop.permute.xlu0 %507
        %511 = vset.pattern.permute.xlu0 0
        %512 = vperm.xlu0 %511, %v498
        %v513 = vpop.permute.xlu0 %512
        %516 = vset.pattern.permute.xlu0 0
        %517 = vperm.xlu0 %516, %v499
        %v518 = vpop.permute.xlu0 %517
        %520 = vst [vmem:[#allocation3 + $0x20] sm:$0xff] %v503
        %521 = vst [vmem:[#allocation3 + $0x28] sm:$0xff] %v503
        %522 = vst [vmem:[#allocation3 + $0x60] sm:$0xff] %v508
        %523 = vst [vmem:[#allocation3 + $0x68] sm:$0xff] %v508
        %524 = vst [vmem:[#allocation3 + $0xa0] sm:$0xff] %v513
        %525 = vst [vmem:[#allocation3 + $0xa8] sm:$0xff] %v513
        %526 = vst [vmem:[#allocation3 + $0xe0] sm:$0xff] %v518
        %527 = vst [vmem:[#allocation3 + $0xe8] sm:$0xff] %v518
        %s528 = sadd.s32 %s387, 3
        %s529 = sld [smem:[#allocation4 + %s528]]
        %s530 = sld [smem:[#allocation7 + %s528]]
        %s531 = scalar_lea.vmem %s370, 12
        %v532 = vld [vmem:[%s531] sm:$0xf]
        %v533 = vunpack.c.l.bf16 %v532
        %s534 = scalar_lea.vmem %s377, 12
        %v535 = vld [vmem:[%s534] sm:$0xf]
        %v536 = vunpack.c.l.bf16 %v535
        %v537 = vstv %s529
        %v538 = vmul.f32 %v537, %v533
        %v539 = vstv %s530
        %v540 = vmul.f32 %v539, %v536
        %v541 = vadd.f32 %v538, %v540
        %542 = vst [vmem:[#allocation2 + $0x18] sm:$0xff] %v541
        %s543 = scalar_lea.vmem %s384, 96
        %v544 = vld [vmem:[%s543] sm:$0xff]
        %v545 = vld [vmem:[%s543 + $0x8] sm:$0xff]
        %v546 = vld [vmem:[%s543 + $0x10] sm:$0xff]
        %v547 = vld [vmem:[%s543 + $0x18] sm:$0xff]
        %549 = vset.pattern.permute.xlu0 0
        %550 = vperm.xlu0 %549, %v544
        %v551 = vpop.permute.xlu0 %550
        %554 = vset.pattern.permute.xlu0 0
        %555 = vperm.xlu0 %554, %v545
        %v556 = vpop.permute.xlu0 %555
        %559 = vset.pattern.permute.xlu0 0
        %560 = vperm.xlu0 %559, %v546
        %v561 = vpop.permute.xlu0 %560
        %564 = vset.pattern.permute.xlu0 0
        %565 = vperm.xlu0 %564, %v547
        %v566 = vpop.permute.xlu0 %565
        %568 = vst [vmem:[#allocation3 + $0x30] sm:$0xff] %v551
        %569 = vst [vmem:[#allocation3 + $0x38] sm:$0xff] %v551
        %570 = vst [vmem:[#allocation3 + $0x70] sm:$0xff] %v556
        %571 = vst [vmem:[#allocation3 + $0x78] sm:$0xff] %v556
        %572 = vst [vmem:[#allocation3 + $0xb0] sm:$0xff] %v561
        %573 = vst [vmem:[#allocation3 + $0xb8] sm:$0xff] %v561
        %574 = vst [vmem:[#allocation3 + $0xf0] sm:$0xff] %v566
        %575 = vst [vmem:[#allocation3 + $0xf8] sm:$0xff] %v566
        %v576 = vld [vmem:[#allocation3] sm:$0xff]
        %v577 = vld [vmem:[#allocation3 + $0x8] sm:$0xff]
        %v578 = vld [vmem:[#allocation3 + $0x10] sm:$0xff]
        %v579 = vld [vmem:[#allocation3 + $0x18] sm:$0xff]
        %v580 = vld [vmem:[#allocation3 + $0x20] sm:$0xff]
        %v581 = vld [vmem:[#allocation3 + $0x28] sm:$0xff]
        %v582 = vld [vmem:[#allocation3 + $0x30] sm:$0xff]
        %v583 = vld [vmem:[#allocation3 + $0x38] sm:$0xff]
        %v584 = vld [vmem:[#allocation3 + $0x40] sm:$0xff]
        %v585 = vld [vmem:[#allocation3 + $0x48] sm:$0xff]
        %v586 = vld [vmem:[#allocation3 + $0x50] sm:$0xff]
        %v587 = vld [vmem:[#allocation3 + $0x58] sm:$0xff]
        %v588 = vld [vmem:[#allocation3 + $0x60] sm:$0xff]
        %v589 = vld [vmem:[#allocation3 + $0x68] sm:$0xff]
        %v590 = vld [vmem:[#allocation3 + $0x70] sm:$0xff]
        %v591 = vld [vmem:[#allocation3 + $0x78] sm:$0xff]
        %v592 = vld [vmem:[#allocation3 + $0x80] sm:$0xff]
        %v593 = vld [vmem:[#allocation3 + $0x88] sm:$0xff]
        %v594 = vld [vmem:[#allocation3 + $0x90] sm:$0xff]
        %v595 = vld [vmem:[#allocation3 + $0x98] sm:$0xff]
        %v596 = vld [vmem:[#allocation3 + $0xa0] sm:$0xff]
        %v597 = vld [vmem:[#allocation3 + $0xa8] sm:$0xff]
        %v598 = vld [vmem:[#allocation3 + $0xb0] sm:$0xff]
        %v599 = vld [vmem:[#allocation3 + $0xb8] sm:$0xff]
        %v600 = vld [vmem:[#allocation3 + $0xc0] sm:$0xff]
        %v601 = vld [vmem:[#allocation3 + $0xc8] sm:$0xff]
        %v602 = vld [vmem:[#allocation3 + $0xd0] sm:$0xff]
        %v603 = vld [vmem:[#allocation3 + $0xd8] sm:$0xff]
        %v604 = vld [vmem:[#allocation3 + $0xe0] sm:$0xff]
        %v605 = vld [vmem:[#allocation3 + $0xe8] sm:$0xff]
        %v606 = vld [vmem:[#allocation3 + $0xf0] sm:$0xff]
        %v607 = vld [vmem:[#allocation3 + $0xf8] sm:$0xff]
        %v608 = vld [vmem:[%s5] sm:$0xff]
        %v609 = vld [vmem:[%s5 + $0x8] sm:$0xff]
        %v610 = vld [vmem:[%s5 + $0x10] sm:$0xff]
        %v611 = vld [vmem:[%s5 + $0x18] sm:$0xff]
        %v612 = vld [vmem:[#allocation2] sm:$0xff]
        %v613 = vld [vmem:[#allocation2 + $0x8] sm:$0xff]
        %v614 = vld [vmem:[#allocation2 + $0x10] sm:$0xff]
        %v615 = vld [vmem:[#allocation2 + $0x18] sm:$0xff]
        %v620 = vcombine.high %v612, %v612
        %v621 = vcombine.high %v613, %v613
        %v622 = vcombine.high %v614, %v614
        %v623 = vcombine.high %v615, %v615
        %vm624 = vcmask 31744
        %v626 = vsel %vm624, %v608, 0
        %v629 = vsel %vm624, %v609, 0
        %v632 = vsel %vm624, %v610, 0
        %v635 = vsel %vm624, %v611, 0
        %vm637 = vcmask 1043456
        %v638 = vsel %vm637, %v612, 0
        %v640 = vsel %vm637, %v620, 0
        %v642 = vsel %vm637, %v613, 0
        %v644 = vsel %vm637, %v621, 0
        %v646 = vsel %vm637, %v614, 0
        %v648 = vsel %vm637, %v622, 0
        %v650 = vsel %vm637, %v615, 0
        %v652 = vsel %vm637, %v623, 0
        %654 = vmatprep.subr.mxu0 0.0
        %655 = vmatpush1.msra.mxu0 0.0
        %656 = vmatprep.subr.mxu0 0.0
        %657 = vmatpush1.msra.mxu0 0.0
        %658 = vmatprep.subr.mxu0 0.0
        %659 = vmatpush1.msra.mxu0 0.0
        %660 = vmatprep.subr.mxu0 0.0
        %661 = vmatpush1.msra.mxu0 0.0
        %662 = vmatprep.subr.mxu0 0.0
        %663 = vmatpush1.msra.mxu0 0.0
        %664 = vmatprep.subr.mxu0 0.0
        %665 = vmatpush1.msra.mxu0 0.0
        %666 = vmatprep.subr.mxu0 0.0
        %667 = vmatpush1.msra.mxu0 0.0
        %668 = vmatprep.subr.mxu0 0.0
        %669 = vmatpush1.msra.mxu0 0.0
        %670 = vmatprep.subr.mxu0 0.0
        %671 = vmatpush1.msra.mxu0 0.0
        %672 = vmatprep.subr.mxu0 0.0
        %673 = vmatpush1.msra.mxu0 0.0
        %674 = vmatprep.subr.mxu0 0.0
        %675 = vmatpush1.msra.mxu0 0.0
        %676 = vmatprep.subr.mxu0 0.0
        %677 = vmatpush1.msra.mxu0 0.0
        %678 = vmatprep.subr.mxu0 0.0
        %679 = vmatpush1.msra.mxu0 0.0
        %680 = vmatprep.subr.mxu0 0.0
        %681 = vmatpush1.msra.mxu0 0.0
        %682 = vmatprep.subr.mxu0 0.0
        %683 = vmatpush1.msra.mxu0 0.0
        %684 = vmatprep.subr.mxu0 %v640
        %685 = vmatpush1.msra.mxu0 %v638
        %686 = vmatprep.subr.mxu0 0.0
        %687 = vmatpush2.msra.mxu0 0.0
        %688 = vmatprep.subr.mxu0 0.0
        %689 = vmatpush2.msra.mxu0 0.0
        %690 = vmatprep.subr.mxu0 0.0
        %691 = vmatpush2.msra.mxu0 0.0
        %692 = vmatprep.subr.mxu0 0.0
        %693 = vmatpush2.msra.mxu0 0.0
        %694 = vmatprep.subr.mxu0 0.0
        %695 = vmatpush2.msra.mxu0 0.0
        %696 = vmatprep.subr.mxu0 0.0
        %697 = vmatpush2.msra.mxu0 0.0
        %698 = vmatprep.subr.mxu0 0.0
        %699 = vmatpush2.msra.mxu0 0.0
        %700 = vmatprep.subr.mxu0 0.0
        %701 = vmatpush2.msra.mxu0 0.0
        %702 = vmatprep.subr.mxu0 0.0
        %703 = vmatpush2.msra.mxu0 0.0
        %704 = vmatprep.subr.mxu0 0.0
        %705 = vmatpush2.msra.mxu0 0.0
        %706 = vmatprep.subr.mxu0 0.0
        %707 = vmatpush2.msra.mxu0 0.0
        %708 = vmatprep.subr.mxu0 0.0
        %709 = vmatpush2.msra.mxu0 0.0
        %710 = vmatprep.subr.mxu0 0.0
        %711 = vmatpush2.msra.mxu0 0.0
        %712 = vmatprep.subr.mxu0 0.0
        %713 = vmatpush2.msra.mxu0 0.0
        %714 = vmatprep.subr.mxu0 0.0
        %715 = vmatpush2.msra.mxu0 0.0
        %716 = vmatprep.subr.mxu0 0.0
        %717 = vmatpush2.msra.mxu0 0.0
        %718 = vmatprep.mubr.f32.mxu0 0.0
        %719 = vmatmul.mubr.f32.gmra.mxu0 %v626
        %v720 = vpop.f32.mrf.mxu0
        %v721 = vadd.f32 0.0, %v720
        %v722 = vpop.f32.mrf.mxu0
        %v723 = vadd.f32 0.0, %v722
        %724 = vmatprep.mubr.f32.mxu0 0.0
        %725 = vmatmul.mubr.f32.gmra.mxu0 %v629
        %v726 = vpop.f32.mrf.mxu0
        %v727 = vadd.f32 0.0, %v726
        %v728 = vpop.f32.mrf.mxu0
        %v729 = vadd.f32 0.0, %v728
        %730 = vmatprep.mubr.f32.mxu0 0.0
        %731 = vmatmul.mubr.f32.gmra.mxu0 %v632
        %v732 = vpop.f32.mrf.mxu0
        %v733 = vadd.f32 0.0, %v732
        %v734 = vpop.f32.mrf.mxu0
        %v735 = vadd.f32 0.0, %v734
        %736 = vmatprep.mubr.f32.mxu0 0.0
        %737 = vmatmul.mubr.f32.gmra.mxu0 %v635
        %v738 = vpop.f32.mrf.mxu0
        %v739 = vadd.f32 0.0, %v738
        %v740 = vpop.f32.mrf.mxu0
        %v741 = vadd.f32 0.0, %v740
        %742 = vdwg.mxu0
        %743 = vmatprep.subr.mxu0 0.0
        %744 = vmatpush1.msra.mxu0 0.0
        %745 = vmatprep.subr.mxu0 0.0
        %746 = vmatpush1.msra.mxu0 0.0
        %747 = vmatprep.subr.mxu0 0.0
        %748 = vmatpush1.msra.mxu0 0.0
        %749 = vmatprep.subr.mxu0 0.0
        %750 = vmatpush1.msra.mxu0 0.0
        %751 = vmatprep.subr.mxu0 0.0
        %752 = vmatpush1.msra.mxu0 0.0
        %753 = vmatprep.subr.mxu0 0.0
        %754 = vmatpush1.msra.mxu0 0.0
        %755 = vmatprep.subr.mxu0 0.0
        %756 = vmatpush1.msra.mxu0 0.0
        %757 = vmatprep.subr.mxu0 0.0
        %758 = vmatpush1.msra.mxu0 0.0
        %759 = vmatprep.subr.mxu0 0.0
        %760 = vmatpush1.msra.mxu0 0.0
        %761 = vmatprep.subr.mxu0 0.0
        %762 = vmatpush1.msra.mxu0 0.0
        %763 = vmatprep.subr.mxu0 0.0
        %764 = vmatpush1.msra.mxu0 0.0
        %765 = vmatprep.subr.mxu0 0.0
        %766 = vmatpush1.msra.mxu0 0.0
        %767 = vmatprep.subr.mxu0 0.0
        %768 = vmatpush1.msra.mxu0 0.0
        %769 = vmatprep.subr.mxu0 0.0
        %770 = vmatpush1.msra.mxu0 0.0
        %771 = vmatprep.subr.mxu0 0.0
        %772 = vmatpush1.msra.mxu0 0.0
        %773 = vmatprep.subr.mxu0 %v644
        %774 = vmatpush1.msra.mxu0 %v642
        %775 = vmatprep.subr.mxu0 0.0
        %776 = vmatpush2.msra.mxu0 0.0
        %777 = vmatprep.subr.mxu0 0.0
        %778 = vmatpush2.msra.mxu0 0.0
        %779 = vmatprep.subr.mxu0 0.0
        %780 = vmatpush2.msra.mxu0 0.0
        %781 = vmatprep.subr.mxu0 0.0
        %782 = vmatpush2.msra.mxu0 0.0
        %783 = vmatprep.subr.mxu0 0.0
        %784 = vmatpush2.msra.mxu0 0.0
        %785 = vmatprep.subr.mxu0 0.0
        %786 = vmatpush2.msra.mxu0 0.0
        %787 = vmatprep.subr.mxu0 0.0
        %788 = vmatpush2.msra.mxu0 0.0
        %789 = vmatprep.subr.mxu0 0.0
        %790 = vmatpush2.msra.mxu0 0.0
        %791 = vmatprep.subr.mxu0 0.0
        %792 = vmatpush2.msra.mxu0 0.0
        %793 = vmatprep.subr.mxu0 0.0
        %794 = vmatpush2.msra.mxu0 0.0
        %795 = vmatprep.subr.mxu0 0.0
        %796 = vmatpush2.msra.mxu0 0.0
        %797 = vmatprep.subr.mxu0 0.0
        %798 = vmatpush2.msra.mxu0 0.0
        %799 = vmatprep.subr.mxu0 0.0
        %800 = vmatpush2.msra.mxu0 0.0
        %801 = vmatprep.subr.mxu0 0.0
        %802 = vmatpush2.msra.mxu0 0.0
        %803 = vmatprep.subr.mxu0 0.0
        %804 = vmatpush2.msra.mxu0 0.0
        %805 = vmatprep.subr.mxu0 0.0
        %806 = vmatpush2.msra.mxu0 0.0
        %807 = vmatprep.mubr.f32.mxu0 0.0
        %808 = vmatmul.mubr.f32.gmra.mxu0 %v626
        %v809 = vpop.f32.mrf.mxu0
        %v810 = vadd.f32 0.0, %v809
        %v811 = vpop.f32.mrf.mxu0
        %v812 = vadd.f32 0.0, %v811
        %813 = vmatprep.mubr.f32.mxu0 0.0
        %814 = vmatmul.mubr.f32.gmra.mxu0 %v629
        %v815 = vpop.f32.mrf.mxu0
        %v816 = vadd.f32 0.0, %v815
        %v817 = vpop.f32.mrf.mxu0
        %v818 = vadd.f32 0.0, %v817
        %819 = vmatprep.mubr.f32.mxu0 0.0
        %820 = vmatmul.mubr.f32.gmra.mxu0 %v632
        %v821 = vpop.f32.mrf.mxu0
        %v822 = vadd.f32 0.0, %v821
        %v823 = vpop.f32.mrf.mxu0
        %v824 = vadd.f32 0.0, %v823
        %825 = vmatprep.mubr.f32.mxu0 0.0
        %826 = vmatmul.mubr.f32.gmra.mxu0 %v635
        %v827 = vpop.f32.mrf.mxu0
        %v828 = vadd.f32 0.0, %v827
        %v829 = vpop.f32.mrf.mxu0
        %v830 = vadd.f32 0.0, %v829
        %831 = vdwg.mxu0
        %832 = vmatprep.subr.mxu0 0.0
        %833 = vmatpush1.msra.mxu0 0.0
        %834 = vmatprep.subr.mxu0 0.0
        %835 = vmatpush1.msra.mxu0 0.0
        %836 = vmatprep.subr.mxu0 0.0
        %837 = vmatpush1.msra.mxu0 0.0
        %838 = vmatprep.subr.mxu0 0.0
        %839 = vmatpush1.msra.mxu0 0.0
        %840 = vmatprep.subr.mxu0 0.0
        %841 = vmatpush1.msra.mxu0 0.0
        %842 = vmatprep.subr.mxu0 0.0
        %843 = vmatpush1.msra.mxu0 0.0
        %844 = vmatprep.subr.mxu0 0.0
        %845 = vmatpush1.msra.mxu0 0.0
        %846 = vmatprep.subr.mxu0 0.0
        %847 = vmatpush1.msra.mxu0 0.0
        %848 = vmatprep.subr.mxu0 0.0
        %849 = vmatpush1.msra.mxu0 0.0
        %850 = vmatprep.subr.mxu0 0.0
        %851 = vmatpush1.msra.mxu0 0.0
        %852 = vmatprep.subr.mxu0 0.0
        %853 = vmatpush1.msra.mxu0 0.0
        %854 = vmatprep.subr.mxu0 0.0
        %855 = vmatpush1.msra.mxu0 0.0
        %856 = vmatprep.subr.mxu0 0.0
        %857 = vmatpush1.msra.mxu0 0.0
        %858 = vmatprep.subr.mxu0 0.0
        %859 = vmatpush1.msra.mxu0 0.0
        %860 = vmatprep.subr.mxu0 0.0
        %861 = vmatpush1.msra.mxu0 0.0
        %862 = vmatprep.subr.mxu0 %v648
        %863 = vmatpush1.msra.mxu0 %v646
        %864 = vmatprep.subr.mxu0 0.0
        %865 = vmatpush2.msra.mxu0 0.0
        %866 = vmatprep.subr.mxu0 0.0
        %867 = vmatpush2.msra.mxu0 0.0
        %868 = vmatprep.subr.mxu0 0.0
        %869 = vmatpush2.msra.mxu0 0.0
        %870 = vmatprep.subr.mxu0 0.0
        %871 = vmatpush2.msra.mxu0 0.0
        %872 = vmatprep.subr.mxu0 0.0
        %873 = vmatpush2.msra.mxu0 0.0
        %874 = vmatprep.subr.mxu0 0.0
        %875 = vmatpush2.msra.mxu0 0.0
        %876 = vmatprep.subr.mxu0 0.0
        %877 = vmatpush2.msra.mxu0 0.0
        %878 = vmatprep.subr.mxu0 0.0
        %879 = vmatpush2.msra.mxu0 0.0
        %880 = vmatprep.subr.mxu0 0.0
        %881 = vmatpush2.msra.mxu0 0.0
        %882 = vmatprep.subr.mxu0 0.0
        %883 = vmatpush2.msra.mxu0 0.0
        %884 = vmatprep.subr.mxu0 0.0
        %885 = vmatpush2.msra.mxu0 0.0
        %886 = vmatprep.subr.mxu0 0.0
        %887 = vmatpush2.msra.mxu0 0.0
        %888 = vmatprep.subr.mxu0 0.0
        %889 = vmatpush2.msra.mxu0 0.0
        %890 = vmatprep.subr.mxu0 0.0
        %891 = vmatpush2.msra.mxu0 0.0
        %892 = vmatprep.subr.mxu0 0.0
        %893 = vmatpush2.msra.mxu0 0.0
        %894 = vmatprep.subr.mxu0 0.0
        %895 = vmatpush2.msra.mxu0 0.0
        %896 = vmatprep.mubr.f32.mxu0 0.0
        %897 = vmatmul.mubr.f32.gmra.mxu0 %v626
        %v898 = vpop.f32.mrf.mxu0
        %v899 = vadd.f32 0.0, %v898
        %v900 = vpop.f32.mrf.mxu0
        %v901 = vadd.f32 0.0, %v900
        %902 = vmatprep.mubr.f32.mxu0 0.0
        %903 = vmatmul.mubr.f32.gmra.mxu0 %v629
        %v904 = vpop.f32.mrf.mxu0
        %v905 = vadd.f32 0.0, %v904
        %v906 = vpop.f32.mrf.mxu0
        %v907 = vadd.f32 0.0, %v906
        %908 = vmatprep.mubr.f32.mxu0 0.0
        %909 = vmatmul.mubr.f32.gmra.mxu0 %v632
        %v910 = vpop.f32.mrf.mxu0
        %v911 = vadd.f32 0.0, %v910
        %v912 = vpop.f32.mrf.mxu0
        %v913 = vadd.f32 0.0, %v912
        %914 = vmatprep.mubr.f32.mxu0 0.0
        %915 = vmatmul.mubr.f32.gmra.mxu0 %v635
        %v916 = vpop.f32.mrf.mxu0
        %v917 = vadd.f32 0.0, %v916
        %v918 = vpop.f32.mrf.mxu0
        %v919 = vadd.f32 0.0, %v918
        %920 = vdwg.mxu0
        %921 = vmatprep.subr.mxu0 0.0
        %922 = vmatpush1.msra.mxu0 0.0
        %923 = vmatprep.subr.mxu0 0.0
        %924 = vmatpush1.msra.mxu0 0.0
        %925 = vmatprep.subr.mxu0 0.0
        %926 = vmatpush1.msra.mxu0 0.0
        %927 = vmatprep.subr.mxu0 0.0
        %928 = vmatpush1.msra.mxu0 0.0
        %929 = vmatprep.subr.mxu0 0.0
        %930 = vmatpush1.msra.mxu0 0.0
        %931 = vmatprep.subr.mxu0 0.0
        %932 = vmatpush1.msra.mxu0 0.0
        %933 = vmatprep.subr.mxu0 0.0
        %934 = vmatpush1.msra.mxu0 0.0
        %935 = vmatprep.subr.mxu0 0.0
        %936 = vmatpush1.msra.mxu0 0.0
        %937 = vmatprep.subr.mxu0 0.0
        %938 = vmatpush1.msra.mxu0 0.0
        %939 = vmatprep.subr.mxu0 0.0
        %940 = vmatpush1.msra.mxu0 0.0
        %941 = vmatprep.subr.mxu0 0.0
        %942 = vmatpush1.msra.mxu0 0.0
        %943 = vmatprep.subr.mxu0 0.0
        %944 = vmatpush1.msra.mxu0 0.0
        %945 = vmatprep.subr.mxu0 0.0
        %946 = vmatpush1.msra.mxu0 0.0
        %947 = vmatprep.subr.mxu0 0.0
        %948 = vmatpush1.msra.mxu0 0.0
        %949 = vmatprep.subr.mxu0 0.0
        %950 = vmatpush1.msra.mxu0 0.0
        %951 = vmatprep.subr.mxu0 %v652
        %952 = vmatpush1.msra.mxu0 %v650
        %953 = vmatprep.subr.mxu0 0.0
        %954 = vmatpush2.msra.mxu0 0.0
        %955 = vmatprep.subr.mxu0 0.0
        %956 = vmatpush2.msra.mxu0 0.0
        %957 = vmatprep.subr.mxu0 0.0
        %958 = vmatpush2.msra.mxu0 0.0
        %959 = vmatprep.subr.mxu0 0.0
        %960 = vmatpush2.msra.mxu0 0.0
        %961 = vmatprep.subr.mxu0 0.0
        %962 = vmatpush2.msra.mxu0 0.0
        %963 = vmatprep.subr.mxu0 0.0
        %964 = vmatpush2.msra.mxu0 0.0
        %965 = vmatprep.subr.mxu0 0.0
        %966 = vmatpush2.msra.mxu0 0.0
        %967 = vmatprep.subr.mxu0 0.0
        %968 = vmatpush2.msra.mxu0 0.0
        %969 = vmatprep.subr.mxu0 0.0
        %970 = vmatpush2.msra.mxu0 0.0
        %971 = vmatprep.subr.mxu0 0.0
        %972 = vmatpush2.msra.mxu0 0.0
        %973 = vmatprep.subr.mxu0 0.0
        %974 = vmatpush2.msra.mxu0 0.0
        %975 = vmatprep.subr.mxu0 0.0
        %976 = vmatpush2.msra.mxu0 0.0
        %977 = vmatprep.subr.mxu0 0.0
        %978 = vmatpush2.msra.mxu0 0.0
        %979 = vmatprep.subr.mxu0 0.0
        %980 = vmatpush2.msra.mxu0 0.0
        %981 = vmatprep.subr.mxu0 0.0
        %982 = vmatpush2.msra.mxu0 0.0
        %983 = vmatprep.subr.mxu0 0.0
        %984 = vmatpush2.msra.mxu0 0.0
        %985 = vmatprep.mubr.f32.mxu0 0.0
        %986 = vmatmul.mubr.f32.gmra.mxu0 %v626
        %v987 = vpop.f32.mrf.mxu0
        %v988 = vadd.f32 0.0, %v987
        %v989 = vpop.f32.mrf.mxu0
        %v990 = vadd.f32 0.0, %v989
        %991 = vmatprep.mubr.f32.mxu0 0.0
        %992 = vmatmul.mubr.f32.gmra.mxu0 %v629
        %v993 = vpop.f32.mrf.mxu0
        %v994 = vadd.f32 0.0, %v993
        %v995 = vpop.f32.mrf.mxu0
        %v996 = vadd.f32 0.0, %v995
        %997 = vmatprep.mubr.f32.mxu0 0.0
        %998 = vmatmul.mubr.f32.gmra.mxu0 %v632
        %v999 = vpop.f32.mrf.mxu0
        %v1000 = vadd.f32 0.0, %v999
        %v1001 = vpop.f32.mrf.mxu0
        %v1002 = vadd.f32 0.0, %v1001
        %1003 = vmatprep.mubr.f32.mxu0 0.0
        %1004 = vmatmul.mubr.f32.gmra.mxu0 %v635
        %v1005 = vpop.f32.mrf.mxu0
        %v1006 = vadd.f32 0.0, %v1005
        %v1007 = vpop.f32.mrf.mxu0
        %v1008 = vadd.f32 0.0, %v1007
        %1009 = vdwg.mxu0
        %v1010 = vadd.f32 %v576, %v721
        %v1011 = vadd.f32 %v577, %v723
        %v1012 = vadd.f32 %v578, %v810
        %v1013 = vadd.f32 %v579, %v812
        %v1014 = vadd.f32 %v580, %v899
        %v1015 = vadd.f32 %v581, %v901
        %v1016 = vadd.f32 %v582, %v988
        %v1017 = vadd.f32 %v583, %v990
        %v1018 = vadd.f32 %v584, %v727
        %v1019 = vadd.f32 %v585, %v729
        %v1020 = vadd.f32 %v586, %v816
        %v1021 = vadd.f32 %v587, %v818
        %v1022 = vadd.f32 %v588, %v905
        %v1023 = vadd.f32 %v589, %v907
        %v1024 = vadd.f32 %v590, %v994
        %v1025 = vadd.f32 %v591, %v996
        %v1026 = vadd.f32 %v592, %v733
        %v1027 = vadd.f32 %v593, %v735
        %v1028 = vadd.f32 %v594, %v822
        %v1029 = vadd.f32 %v595, %v824
        %v1030 = vadd.f32 %v596, %v911
        %v1031 = vadd.f32 %v597, %v913
        %v1032 = vadd.f32 %v598, %v1000
        %v1033 = vadd.f32 %v599, %v1002
        %v1034 = vadd.f32 %v600, %v739
        %v1035 = vadd.f32 %v601, %v741
        %v1036 = vadd.f32 %v602, %v828
        %v1037 = vadd.f32 %v603, %v830
        %v1038 = vadd.f32 %v604, %v917
        %v1039 = vadd.f32 %v605, %v919
        %v1040 = vadd.f32 %v606, %v1006
        %v1041 = vadd.f32 %v607, %v1008
        %1042 = vst [vmem:[#allocation3] sm:$0xff] %v1010
        %1043 = vst [vmem:[#allocation3 + $0x8] sm:$0xff] %v1011
        %1044 = vst [vmem:[#allocation3 + $0x10] sm:$0xff] %v1012
        %1045 = vst [vmem:[#allocation3 + $0x18] sm:$0xff] %v1013
        %1046 = vst [vmem:[#allocation3 + $0x20] sm:$0xff] %v1014
        %1047 = vst [vmem:[#allocation3 + $0x28] sm:$0xff] %v1015
        %1048 = vst [vmem:[#allocation3 + $0x30] sm:$0xff] %v1016
        %1049 = vst [vmem:[#allocation3 + $0x38] sm:$0xff] %v1017
        %1050 = vst [vmem:[#allocation3 + $0x40] sm:$0xff] %v1018
        %1051 = vst [vmem:[#allocation3 + $0x48] sm:$0xff] %v1019
        %1052 = vst [vmem:[#allocation3 + $0x50] sm:$0xff] %v1020
        %1053 = vst [vmem:[#allocation3 + $0x58] sm:$0xff] %v1021
        %1054 = vst [vmem:[#allocation3 + $0x60] sm:$0xff] %v1022
        %1055 = vst [vmem:[#allocation3 + $0x68] sm:$0xff] %v1023
        %1056 = vst [vmem:[#allocation3 + $0x70] sm:$0xff] %v1024
        %1057 = vst [vmem:[#allocation3 + $0x78] sm:$0xff] %v1025
        %1058 = vst [vmem:[#allocation3 + $0x80] sm:$0xff] %v1026
        %1059 = vst [vmem:[#allocation3 + $0x88] sm:$0xff] %v1027
        %1060 = vst [vmem:[#allocation3 + $0x90] sm:$0xff] %v1028
        %1061 = vst [vmem:[#allocation3 + $0x98] sm:$0xff] %v1029
        %1062 = vst [vmem:[#allocation3 + $0xa0] sm:$0xff] %v1030
        %1063 = vst [vmem:[#allocation3 + $0xa8] sm:$0xff] %v1031
        %1064 = vst [vmem:[#allocation3 + $0xb0] sm:$0xff] %v1032
        %1065 = vst [vmem:[#allocation3 + $0xb8] sm:$0xff] %v1033
        %1066 = vst [vmem:[#allocation3 + $0xc0] sm:$0xff] %v1034
        %1067 = vst [vmem:[#allocation3 + $0xc8] sm:$0xff] %v1035
        %1068 = vst [vmem:[#allocation3 + $0xd0] sm:$0xff] %v1036
        %1069 = vst [vmem:[#allocation3 + $0xd8] sm:$0xff] %v1037
        %1070 = vst [vmem:[#allocation3 + $0xe0] sm:$0xff] %v1038
        %1071 = vst [vmem:[#allocation3 + $0xe8] sm:$0xff] %v1039
        %1072 = vst [vmem:[#allocation3 + $0xf0] sm:$0xff] %v1040
        %1073 = vst [vmem:[#allocation3 + $0xf8] sm:$0xff] %v1041
        %v1074 = vld [vmem:[%s6] sm:$0xf]
        %v1075 = vld [vmem:[#allocation3] sm:$0xff]
        %v1076 = vld [vmem:[#allocation3 + $0x8] sm:$0xff]
        %v1077 = vld [vmem:[#allocation3 + $0x10] sm:$0xff]
        %v1078 = vld [vmem:[#allocation3 + $0x18] sm:$0xff]
        %v1079 = vld [vmem:[#allocation3 + $0x20] sm:$0xff]
        %v1080 = vld [vmem:[#allocation3 + $0x28] sm:$0xff]
        %v1081 = vld [vmem:[#allocation3 + $0x30] sm:$0xff]
        %v1082 = vld [vmem:[#allocation3 + $0x38] sm:$0xff]
        %v1083 = vld [vmem:[#allocation3 + $0x40] sm:$0xff]
        %v1084 = vld [vmem:[#allocation3 + $0x48] sm:$0xff]
        %v1085 = vld [vmem:[#allocation3 + $0x50] sm:$0xff]
        %v1086 = vld [vmem:[#allocation3 + $0x58] sm:$0xff]
        %v1087 = vld [vmem:[#allocation3 + $0x60] sm:$0xff]
        %v1088 = vld [vmem:[#allocation3 + $0x68] sm:$0xff]
        %v1089 = vld [vmem:[#allocation3 + $0x70] sm:$0xff]
        %v1090 = vld [vmem:[#allocation3 + $0x78] sm:$0xff]
        %v1091 = vld [vmem:[#allocation3 + $0x80] sm:$0xff]
        %v1092 = vld [vmem:[#allocation3 + $0x88] sm:$0xff]
        %v1093 = vld [vmem:[#allocation3 + $0x90] sm:$0xff]
        %v1094 = vld [vmem:[#allocation3 + $0x98] sm:$0xff]
        %v1095 = vld [vmem:[#allocation3 + $0xa0] sm:$0xff]
        %v1096 = vld [vmem:[#allocation3 + $0xa8] sm:$0xff]
        %v1097 = vld [vmem:[#allocation3 + $0xb0] sm:$0xff]
        %v1098 = vld [vmem:[#allocation3 + $0xb8] sm:$0xff]
        %v1099 = vld [vmem:[#allocation3 + $0xc0] sm:$0xff]
        %v1100 = vld [vmem:[#allocation3 + $0xc8] sm:$0xff]
        %v1101 = vld [vmem:[#allocation3 + $0xd0] sm:$0xff]
        %v1102 = vld [vmem:[#allocation3 + $0xd8] sm:$0xff]
        %v1103 = vld [vmem:[#allocation3 + $0xe0] sm:$0xff]
        %v1104 = vld [vmem:[#allocation3 + $0xe8] sm:$0xff]
        %v1105 = vld [vmem:[#allocation3 + $0xf0] sm:$0xff]
        %v1106 = vld [vmem:[#allocation3 + $0xf8] sm:$0xff]
        %v1107 = vmax.f32 %v1075, 0.0
        %v1108 = vmax.f32 %v1076, 0.0
        %v1109 = vmax.f32 %v1077, 0.0
        %v1110 = vmax.f32 %v1078, 0.0
        %v1111 = vmax.f32 %v1079, 0.0
        %v1112 = vmax.f32 %v1080, 0.0
        %v1113 = vmax.f32 %v1081, 0.0
        %v1114 = vmax.f32 %v1082, 0.0
        %v1115 = vmax.f32 %v1083, 0.0
        %v1116 = vmax.f32 %v1084, 0.0
        %v1117 = vmax.f32 %v1085, 0.0
        %v1118 = vmax.f32 %v1086, 0.0
        %v1119 = vmax.f32 %v1087, 0.0
        %v1120 = vmax.f32 %v1088, 0.0
        %v1121 = vmax.f32 %v1089, 0.0
        %v1122 = vmax.f32 %v1090, 0.0
        %v1123 = vmax.f32 %v1091, 0.0
        %v1124 = vmax.f32 %v1092, 0.0
        %v1125 = vmax.f32 %v1093, 0.0
        %v1126 = vmax.f32 %v1094, 0.0
        %v1127 = vmax.f32 %v1095, 0.0
        %v1128 = vmax.f32 %v1096, 0.0
        %v1129 = vmax.f32 %v1097, 0.0
        %v1130 = vmax.f32 %v1098, 0.0
        %v1131 = vmax.f32 %v1099, 0.0
        %v1132 = vmax.f32 %v1100, 0.0
        %v1133 = vmax.f32 %v1101, 0.0
        %v1134 = vmax.f32 %v1102, 0.0
        %v1135 = vmax.f32 %v1103, 0.0
        %v1136 = vmax.f32 %v1104, 0.0
        %v1137 = vmax.f32 %v1105, 0.0
        %v1138 = vmax.f32 %v1106, 0.0
        %v1139 = vld [vmem:[%s7] sm:$0xf]
        %1141 = vset.pattern.permute.xlu0 0
        %1142 = vperm.xlu0 %1141, %v1139
        %v1143 = vpop.permute.xlu0 %1142
        %vm1145 = vcmask 261120
        %v1147 = vsel %vm1145, %v1074, 0
        %1149 = vmatprep.subr.mxu0 0.0
        %1150 = vmatpush1.msra.mxu0 0.0
        %1151 = vmatprep.subr.mxu0 0.0
        %1152 = vmatpush1.msra.mxu0 0.0
        %1153 = vmatprep.subr.mxu0 0.0
        %1154 = vmatpush1.msra.mxu0 0.0
        %1155 = vmatprep.subr.mxu0 0.0
        %1156 = vmatpush1.msra.mxu0 0.0
        %1157 = vmatprep.subr.mxu0 0.0
        %1158 = vmatpush1.msra.mxu0 0.0
        %1159 = vmatprep.subr.mxu0 0.0
        %1160 = vmatpush1.msra.mxu0 0.0
        %1161 = vmatprep.subr.mxu0 0.0
        %1162 = vmatpush1.msra.mxu0 0.0
        %1163 = vmatprep.subr.mxu0 0.0
        %1164 = vmatpush1.msra.mxu0 0.0
        %1165 = vmatprep.subr.mxu0 0.0
        %1166 = vmatpush1.msra.mxu0 0.0
        %1167 = vmatprep.subr.mxu0 0.0
        %1168 = vmatpush1.msra.mxu0 0.0
        %1169 = vmatprep.subr.mxu0 0.0
        %1170 = vmatpush1.msra.mxu0 0.0
        %1171 = vmatprep.subr.mxu0 0.0
        %1172 = vmatpush1.msra.mxu0 0.0
        %1173 = vmatprep.subr.mxu0 %v1132
        %1174 = vmatpush1.msra.mxu0 %v1131
        %1175 = vmatprep.subr.mxu0 %v1124
        %1176 = vmatpush1.msra.mxu0 %v1123
        %1177 = vmatprep.subr.mxu0 %v1116
        %1178 = vmatpush1.msra.mxu0 %v1115
        %1179 = vmatprep.subr.mxu0 %v1108
        %1180 = vmatpush1.msra.mxu0 %v1107
        %1181 = vmatprep.subr.mxu0 0.0
        %1182 = vmatpush2.msra.mxu0 0.0
        %1183 = vmatprep.subr.mxu0 0.0
        %1184 = vmatpush2.msra.mxu0 0.0
        %1185 = vmatprep.subr.mxu0 0.0
        %1186 = vmatpush2.msra.mxu0 0.0
        %1187 = vmatprep.subr.mxu0 0.0
        %1188 = vmatpush2.msra.mxu0 0.0
        %1189 = vmatprep.subr.mxu0 0.0
        %1190 = vmatpush2.msra.mxu0 0.0
        %1191 = vmatprep.subr.mxu0 0.0
        %1192 = vmatpush2.msra.mxu0 0.0
        %1193 = vmatprep.subr.mxu0 0.0
        %1194 = vmatpush2.msra.mxu0 0.0
        %1195 = vmatprep.subr.mxu0 0.0
        %1196 = vmatpush2.msra.mxu0 0.0
        %1197 = vmatprep.subr.mxu0 0.0
        %1198 = vmatpush2.msra.mxu0 0.0
        %1199 = vmatprep.subr.mxu0 0.0
        %1200 = vmatpush2.msra.mxu0 0.0
        %1201 = vmatprep.subr.mxu0 0.0
        %1202 = vmatpush2.msra.mxu0 0.0
        %1203 = vmatprep.subr.mxu0 0.0
        %1204 = vmatpush2.msra.mxu0 0.0
        %1205 = vmatprep.subr.mxu0 0.0
        %1206 = vmatpush2.msra.mxu0 0.0
        %1207 = vmatprep.subr.mxu0 0.0
        %1208 = vmatpush2.msra.mxu0 0.0
        %1209 = vmatprep.subr.mxu0 0.0
        %1210 = vmatpush2.msra.mxu0 0.0
        %1211 = vmatprep.subr.mxu0 0.0
        %1212 = vmatpush2.msra.mxu0 0.0
        %1213 = vmatprep.mubr.f32.mxu0 0.0
        %1214 = vmatmul.mubr.f32.gmra.mxu0 %v1147
        %v1215 = vpop.f32.mrf.mxu0
        %v1216 = vadd.f32 %v1143, %v1215
        %v1217 = vpop.f32.mrf.mxu0
        %v1218 = vadd.f32 %v1143, %v1217
        %1219 = vdwg.mxu0
        %1220 = vmatprep.subr.mxu0 0.0
        %1221 = vmatpush1.msra.mxu0 0.0
        %1222 = vmatprep.subr.mxu0 0.0
        %1223 = vmatpush1.msra.mxu0 0.0
        %1224 = vmatprep.subr.mxu0 0.0
        %1225 = vmatpush1.msra.mxu0 0.0
        %1226 = vmatprep.subr.mxu0 0.0
        %1227 = vmatpush1.msra.mxu0 0.0
        %1228 = vmatprep.subr.mxu0 0.0
        %1229 = vmatpush1.msra.mxu0 0.0
        %1230 = vmatprep.subr.mxu0 0.0
        %1231 = vmatpush1.msra.mxu0 0.0
        %1232 = vmatprep.subr.mxu0 0.0
        %1233 = vmatpush1.msra.mxu0 0.0
        %1234 = vmatprep.subr.mxu0 0.0
        %1235 = vmatpush1.msra.mxu0 0.0
        %1236 = vmatprep.subr.mxu0 0.0
        %1237 = vmatpush1.msra.mxu0 0.0
        %1238 = vmatprep.subr.mxu0 0.0
        %1239 = vmatpush1.msra.mxu0 0.0
        %1240 = vmatprep.subr.mxu0 0.0
        %1241 = vmatpush1.msra.mxu0 0.0
        %1242 = vmatprep.subr.mxu0 0.0
        %1243 = vmatpush1.msra.mxu0 0.0
        %1244 = vmatprep.subr.mxu0 %v1134
        %1245 = vmatpush1.msra.mxu0 %v1133
        %1246 = vmatprep.subr.mxu0 %v1126
        %1247 = vmatpush1.msra.mxu0 %v1125
        %1248 = vmatprep.subr.mxu0 %v1118
        %1249 = vmatpush1.msra.mxu0 %v1117
        %1250 = vmatprep.subr.mxu0 %v1110
        %1251 = vmatpush1.msra.mxu0 %v1109
        %1252 = vmatprep.subr.mxu0 0.0
        %1253 = vmatpush2.msra.mxu0 0.0
        %1254 = vmatprep.subr.mxu0 0.0
        %1255 = vmatpush2.msra.mxu0 0.0
        %1256 = vmatprep.subr.mxu0 0.0
        %1257 = vmatpush2.msra.mxu0 0.0
        %1258 = vmatprep.subr.mxu0 0.0
        %1259 = vmatpush2.msra.mxu0 0.0
        %1260 = vmatprep.subr.mxu0 0.0
        %1261 = vmatpush2.msra.mxu0 0.0
        %1262 = vmatprep.subr.mxu0 0.0
        %1263 = vmatpush2.msra.mxu0 0.0
        %1264 = vmatprep.subr.mxu0 0.0
        %1265 = vmatpush2.msra.mxu0 0.0
        %1266 = vmatprep.subr.mxu0 0.0
        %1267 = vmatpush2.msra.mxu0 0.0
        %1268 = vmatprep.subr.mxu0 0.0
        %1269 = vmatpush2.msra.mxu0 0.0
        %1270 = vmatprep.subr.mxu0 0.0
        %1271 = vmatpush2.msra.mxu0 0.0
        %1272 = vmatprep.subr.mxu0 0.0
        %1273 = vmatpush2.msra.mxu0 0.0
        %1274 = vmatprep.subr.mxu0 0.0
        %1275 = vmatpush2.msra.mxu0 0.0
        %1276 = vmatprep.subr.mxu0 0.0
        %1277 = vmatpush2.msra.mxu0 0.0
        %1278 = vmatprep.subr.mxu0 0.0
        %1279 = vmatpush2.msra.mxu0 0.0
        %1280 = vmatprep.subr.mxu0 0.0
        %1281 = vmatpush2.msra.mxu0 0.0
        %1282 = vmatprep.subr.mxu0 0.0
        %1283 = vmatpush2.msra.mxu0 0.0
        %1284 = vmatprep.mubr.f32.mxu0 0.0
        %1285 = vmatmul.mubr.f32.gmra.mxu0 %v1147
        %v1286 = vpop.f32.mrf.mxu0
        %v1287 = vadd.f32 %v1143, %v1286
        %v1288 = vpop.f32.mrf.mxu0
        %v1289 = vadd.f32 %v1143, %v1288
        %1290 = vdwg.mxu0
        %1291 = vmatprep.subr.mxu0 0.0
        %1292 = vmatpush1.msra.mxu0 0.0
        %1293 = vmatprep.subr.mxu0 0.0
        %1294 = vmatpush1.msra.mxu0 0.0
        %1295 = vmatprep.subr.mxu0 0.0
        %1296 = vmatpush1.msra.mxu0 0.0
        %1297 = vmatprep.subr.mxu0 0.0
        %1298 = vmatpush1.msra.mxu0 0.0
        %1299 = vmatprep.subr.mxu0 0.0
        %1300 = vmatpush1.msra.mxu0 0.0
        %1301 = vmatprep.subr.mxu0 0.0
        %1302 = vmatpush1.msra.mxu0 0.0
        %1303 = vmatprep.subr.mxu0 0.0
        %1304 = vmatpush1.msra.mxu0 0.0
        %1305 = vmatprep.subr.mxu0 0.0
        %1306 = vmatpush1.msra.mxu0 0.0
        %1307 = vmatprep.subr.mxu0 0.0
        %1308 = vmatpush1.msra.mxu0 0.0
        %1309 = vmatprep.subr.mxu0 0.0
        %1310 = vmatpush1.msra.mxu0 0.0
        %1311 = vmatprep.subr.mxu0 0.0
        %1312 = vmatpush1.msra.mxu0 0.0
        %1313 = vmatprep.subr.mxu0 0.0
        %1314 = vmatpush1.msra.mxu0 0.0
        %1315 = vmatprep.subr.mxu0 %v1136
        %1316 = vmatpush1.msra.mxu0 %v1135
        %1317 = vmatprep.subr.mxu0 %v1128
        %1318 = vmatpush1.msra.mxu0 %v1127
        %1319 = vmatprep.subr.mxu0 %v1120
        %1320 = vmatpush1.msra.mxu0 %v1119
        %1321 = vmatprep.subr.mxu0 %v1112
        %1322 = vmatpush1.msra.mxu0 %v1111
        %1323 = vmatprep.subr.mxu0 0.0
        %1324 = vmatpush2.msra.mxu0 0.0
        %1325 = vmatprep.subr.mxu0 0.0
        %1326 = vmatpush2.msra.mxu0 0.0
        %1327 = vmatprep.subr.mxu0 0.0
        %1328 = vmatpush2.msra.mxu0 0.0
        %1329 = vmatprep.subr.mxu0 0.0
        %1330 = vmatpush2.msra.mxu0 0.0
        %1331 = vmatprep.subr.mxu0 0.0
        %1332 = vmatpush2.msra.mxu0 0.0
        %1333 = vmatprep.subr.mxu0 0.0
        %1334 = vmatpush2.msra.mxu0 0.0
        %1335 = vmatprep.subr.mxu0 0.0
        %1336 = vmatpush2.msra.mxu0 0.0
        %1337 = vmatprep.subr.mxu0 0.0
        %1338 = vmatpush2.msra.mxu0 0.0
        %1339 = vmatprep.subr.mxu0 0.0
        %1340 = vmatpush2.msra.mxu0 0.0
        %1341 = vmatprep.subr.mxu0 0.0
        %1342 = vmatpush2.msra.mxu0 0.0
        %1343 = vmatprep.subr.mxu0 0.0
        %1344 = vmatpush2.msra.mxu0 0.0
        %1345 = vmatprep.subr.mxu0 0.0
        %1346 = vmatpush2.msra.mxu0 0.0
        %1347 = vmatprep.subr.mxu0 0.0
        %1348 = vmatpush2.msra.mxu0 0.0
        %1349 = vmatprep.subr.mxu0 0.0
        %1350 = vmatpush2.msra.mxu0 0.0
        %1351 = vmatprep.subr.mxu0 0.0
        %1352 = vmatpush2.msra.mxu0 0.0
        %1353 = vmatprep.subr.mxu0 0.0
        %1354 = vmatpush2.msra.mxu0 0.0
        %1355 = vmatprep.mubr.f32.mxu0 0.0
        %1356 = vmatmul.mubr.f32.gmra.mxu0 %v1147
        %v1357 = vpop.f32.mrf.mxu0
        %v1358 = vadd.f32 %v1143, %v1357
        %v1359 = vpop.f32.mrf.mxu0
        %v1360 = vadd.f32 %v1143, %v1359
        %1361 = vdwg.mxu0
        %1362 = vmatprep.subr.mxu0 0.0
        %1363 = vmatpush1.msra.mxu0 0.0
        %1364 = vmatprep.subr.mxu0 0.0
        %1365 = vmatpush1.msra.mxu0 0.0
        %1366 = vmatprep.subr.mxu0 0.0
        %1367 = vmatpush1.msra.mxu0 0.0
        %1368 = vmatprep.subr.mxu0 0.0
        %1369 = vmatpush1.msra.mxu0 0.0
        %1370 = vmatprep.subr.mxu0 0.0
        %1371 = vmatpush1.msra.mxu0 0.0
        %1372 = vmatprep.subr.mxu0 0.0
        %1373 = vmatpush1.msra.mxu0 0.0
        %1374 = vmatprep.subr.mxu0 0.0
        %1375 = vmatpush1.msra.mxu0 0.0
        %1376 = vmatprep.subr.mxu0 0.0
        %1377 = vmatpush1.msra.mxu0 0.0
        %1378 = vmatprep.subr.mxu0 0.0
        %1379 = vmatpush1.msra.mxu0 0.0
        %1380 = vmatprep.subr.mxu0 0.0
        %1381 = vmatpush1.msra.mxu0 0.0
        %1382 = vmatprep.subr.mxu0 0.0
        %1383 = vmatpush1.msra.mxu0 0.0
        %1384 = vmatprep.subr.mxu0 0.0
        %1385 = vmatpush1.msra.mxu0 0.0
        %1386 = vmatprep.subr.mxu0 %v1138
        %1387 = vmatpush1.msra.mxu0 %v1137
        %1388 = vmatprep.subr.mxu0 %v1130
        %1389 = vmatpush1.msra.mxu0 %v1129
        %1390 = vmatprep.subr.mxu0 %v1122
        %1391 = vmatpush1.msra.mxu0 %v1121
        %1392 = vmatprep.subr.mxu0 %v1114
        %1393 = vmatpush1.msra.mxu0 %v1113
        %1394 = vmatprep.subr.mxu0 0.0
        %1395 = vmatpush2.msra.mxu0 0.0
        %1396 = vmatprep.subr.mxu0 0.0
        %1397 = vmatpush2.msra.mxu0 0.0
        %1398 = vmatprep.subr.mxu0 0.0
        %1399 = vmatpush2.msra.mxu0 0.0
        %1400 = vmatprep.subr.mxu0 0.0
        %1401 = vmatpush2.msra.mxu0 0.0
        %1402 = vmatprep.subr.mxu0 0.0
        %1403 = vmatpush2.msra.mxu0 0.0
        %1404 = vmatprep.subr.mxu0 0.0
        %1405 = vmatpush2.msra.mxu0 0.0
        %1406 = vmatprep.subr.mxu0 0.0
        %1407 = vmatpush2.msra.mxu0 0.0
        %1408 = vmatprep.subr.mxu0 0.0
        %1409 = vmatpush2.msra.mxu0 0.0
        %1410 = vmatprep.subr.mxu0 0.0
        %1411 = vmatpush2.msra.mxu0 0.0
        %1412 = vmatprep.subr.mxu0 0.0
        %1413 = vmatpush2.msra.mxu0 0.0
        %1414 = vmatprep.subr.mxu0 0.0
        %1415 = vmatpush2.msra.mxu0 0.0
        %1416 = vmatprep.subr.mxu0 0.0
        %1417 = vmatpush2.msra.mxu0 0.0
        %1418 = vmatprep.subr.mxu0 0.0
        %1419 = vmatpush2.msra.mxu0 0.0
        %1420 = vmatprep.subr.mxu0 0.0
        %1421 = vmatpush2.msra.mxu0 0.0
        %1422 = vmatprep.subr.mxu0 0.0
        %1423 = vmatpush2.msra.mxu0 0.0
        %1424 = vmatprep.subr.mxu0 0.0
        %1425 = vmatpush2.msra.mxu0 0.0
        %1426 = vmatprep.mubr.f32.mxu0 0.0
        %1427 = vmatmul.mubr.f32.gmra.mxu0 %v1147
        %v1428 = vpop.f32.mrf.mxu0
        %v1429 = vadd.f32 %v1143, %v1428
        %v1430 = vpop.f32.mrf.mxu0
        %v1431 = vadd.f32 %v1143, %v1430
        %1432 = vdwg.mxu0
        %v1433 = vld [vmem:[%s377] sm:$0xf]
        %v1434 = vunpack.c.l.bf16 %v1433
        %v1436 = vcombine.high %v1434, %v1434
        %v1438 = vsub.f32 %v1216, %v1434
        %v1439 = vsub.f32 %v1218, %v1436
        %v1440 = vmul.f32 %v1438, %v1438
        %v1441 = vmul.f32 %v1439, %v1439
        %v1444 = vcombine.low %v1440, %v1441
        %1446 = vst [vmem:[%s364] sm:$0xff] %v1444
        %v1447 = vld [vmem:[%s438] sm:$0xf]
        %v1448 = vunpack.c.l.bf16 %v1447
        %v1450 = vcombine.high %v1448, %v1448
        %v1452 = vsub.f32 %v1287, %v1448
        %v1453 = vsub.f32 %v1289, %v1450
        %v1454 = vmul.f32 %v1452, %v1452
        %v1455 = vmul.f32 %v1453, %v1453
        %v1458 = vcombine.low %v1454, %v1455
        %s1460 = scalar_lea.vmem %s364, 8 [#allocation9]
        %1461 = vst [vmem:[%s1460] sm:$0xff] %v1458
        %v1462 = vld [vmem:[%s486] sm:$0xf]
        %v1463 = vunpack.c.l.bf16 %v1462
        %v1465 = vcombine.high %v1463, %v1463
        %v1467 = vsub.f32 %v1358, %v1463
        %v1468 = vsub.f32 %v1360, %v1465
        %v1469 = vmul.f32 %v1467, %v1467
        %v1470 = vmul.f32 %v1468, %v1468
        %v1473 = vcombine.low %v1469, %v1470
        %s1475 = scalar_lea.vmem %s364, 16 [#allocation9]
        %1476 = vst [vmem:[%s1475] sm:$0xff] %v1473
        %v1477 = vld [vmem:[%s534] sm:$0xf]
        %v1478 = vunpack.c.l.bf16 %v1477
        %v1480 = vcombine.high %v1478, %v1478
        %v1482 = vsub.f32 %v1429, %v1478
        %v1483 = vsub.f32 %v1431, %v1480
        %v1484 = vmul.f32 %v1482, %v1482
        %v1485 = vmul.f32 %v1483, %v1483
        %v1488 = vcombine.low %v1484, %v1485
        %s1490 = scalar_lea.vmem %s364, 24 [#allocation9]
        %1491 = vst [vmem:[%s1490] sm:$0xff] %v1488
        %s1492 = sand.u32 %s215, 1
        %s1493 = scalar_lea.sflag [#allocation5], %s1492
        %s1494 = sand.u32 %s215, 1
        %s1495 = smul.addr %s1494, 32
        %s1496 = scalar_lea.vmem [#allocation9], %s1495
        // Predicated region
        $region61: #{tpu_custom_call.1} parent=51 // pred_check
          %p1497 = pneg %p225
        $region62: #{tpu_custom_call.1} parent=51 // pred_check_branch
          %1499 = sbr.rel (%p1497) target = $region64
        $region63: #{tpu_custom_call.1} parent=51 // pred_region
          %s1500 = smul.u32 4, %s24
          %s1502 = ssub.s32 512, 512
          %1503 = vsyncadd %s1493, %s1502
          %s1504 = smul.addr %s1500, 2
          %s1505 = smul.addr %s1504, 64
          %s1506 = scalar_lea.hbm %s8, %s1505
          %s1507 = sshll.u32 %s1496, 4
          %s1508 = int_to_ptr.vmem [resolvable:$true] %s1507
          %1513 = dma.vmem_to_hbm [thread:$0]  %s1508, 512, %s1506, %s1493, 128, 128, 8
        $region64: #{tpu_custom_call.1} parent=51 // pred_fallthru
          _
      $region52: #{tpu_custom_call.1} parent=5 // pred_fallthru
        _
      %p1514 = scmp.le.s32.totalorder 2, %s19
      // Predicated region
      $region65: #{tpu_custom_call.1} parent=5 // pred_check
        %p1515 = pneg %p1514
      $region66: #{tpu_custom_call.1} parent=5 // pred_check_branch
        %1517 = sbr.rel (%p1515) target = $region68
      $region67: #{tpu_custom_call.1} parent=5 // pred_region
        %s1518 = ssub.s32 %s19, 2
        // Predicated region
        $region69: #{tpu_custom_call.1} parent=67 // pred_check
          %p1519 = pneg %p231
        $region70: #{tpu_custom_call.1} parent=67 // pred_check_branch
          %1521 = sbr.rel (%p1519) target = $region72
        $region71: #{tpu_custom_call.1} parent=67 // pred_region
          %s1522 = sand.u32 %s216, 1
          %s1523 = scalar_lea.sflag [#allocation5], %s1522
          %s1524 = sand.u32 %s216, 1
          %s1525 = smul.addr %s1524, 32
          %s1526 = scalar_lea.vmem [#allocation9], %s1525
          %1527 = dma.done %s1523, 512
        $region72: #{tpu_custom_call.1} parent=67 // pred_fallthru
          _
      $region68: #{tpu_custom_call.1} parent=5 // pred_fallthru
        _
    $region6: #{tpu_custom_call.1} parent=1 // loop_footer
      %s23 = sadd.s32 1, %s19
    $region7: #{tpu_custom_call.1} parent=1 // loop_footer_branch
      %18 = sbr.rel target = $region3
    $region8: #{tpu_custom_call.1} parent=1 // loop_exit
      _
    %1528 = vsyncpa [#allocation5], 1
    %s1529 = scalar_lea.sflag [#allocation5], 1
    %1530 = vsyncpa %s1529, 1
    %1531 = vsyncpa [#allocation6], 1
    %s1532 = scalar_lea.sflag [#allocation6], 1
    %1533 = vsyncpa %s1532, 1
    %1534 = vsyncpa [#allocation8], 1

</llo_original>
